<compile_context>
chip_gen: v7x
topology: tpu7x:2x2x1
jax: 0.10.0
libtpu: 0.0.40
codegen_flags: <defaults>
</compile_context>

<pallas_src>
import functools
import math

import jax
import jax.numpy as jnp
from jax.experimental import pallas as pl
from jax.experimental.pallas import tpu as pltpu


_VMEM_BUDGET_BYTES = 44 * 1024 * 1024  # tile-plan budget, safe under v7x's 64 MiB
_VMEM_LIMIT_BYTES = 48 * 1024 * 1024   # raised scoped-VMEM limit (default is 16-32 MiB)


def _round_up(x, m):
    return ((x + m - 1) // m) * m


def _pad2d(arr, rows, cols):
    r, c = arr.shape
    return jnp.pad(arr, ((0, rows - r), (0, cols - c)))


def _sage_layer_kernel(a_ref, xk_ref, xi_ref, invdeg_ref, w_self_ref,
                       w_neigh_ref, b_ref, o_ref, acc_ref, self_ref,
                       *, apply_relu):
    """One SAGEConv('mean') layer, tiled over (row tile i, contraction tile k).

    a_ref       : (tm, tk)   int8 0/1 (or bf16 weights), unnormalized adjacency A[i, k]
    xk_ref      : (tk, Fp)   bf16 neighbor-feature rows X[k]
    xi_ref      : (tm, Fp)   bf16 self-feature rows X[i]
    invdeg_ref  : (tm, 1)    f32 1/deg_in for rows i
    w_self_ref  : (Fp, Hp)   bf16 self weights
    w_neigh_ref : (Fp, Hp)   bf16 neighbor weights
    b_ref       : (1, Hp)    f32 bias
    o_ref       : (tm, Hp)   bf16/f32 output rows (resident across k)
    acc_ref     : (tm, Fp)   f32 VMEM neighbor-sum accumulator
    self_ref    : (tm, Hp)   f32 VMEM hoisted x_i @ W_self + bias
    """
    k = pl.program_id(1)

    # Partial (unnormalized) neighbor sum: A[i, k] @ X[k].  A is streamed narrow
    # (int8/bf16) and widened on the VPU; MXU runs bf16 with f32 accumulation.
    part = jnp.dot(a_ref[...].astype(jnp.bfloat16), xk_ref[...],
                   preferred_element_type=jnp.float32)

    @pl.when(k == 0)
    def _first():
        # Direct overwrite (no separate zero-init store pass), and hoist the
        # k-independent self projection here so the last k step stays lean.
        acc_ref[...] = part
        self_ref[...] = (
            jnp.dot(xi_ref[...], w_self_ref[...],
                    preferred_element_type=jnp.float32) + b_ref[...])

    @pl.when(k > 0)
    def _accumulate():
        acc_ref[...] += part

    @pl.when(k == pl.num_programs(1) - 1)
    def _finalize():
        # Mean aggregation: scale the in-edge sum by 1/deg_in in f32, then the
        # neighbor projection.  No concat staging buffer.
        neigh = (acc_ref[...] * invdeg_ref[...]).astype(jnp.bfloat16)
        out = self_ref[...] + jnp.dot(neigh, w_neigh_ref[...],
                                      preferred_element_type=jnp.float32)
        if apply_relu:
            out = jnp.maximum(out, 0.0)
        o_ref[...] = out.astype(o_ref.dtype)


def _vmem_bytes(tm, tk, f_pad, h_pad, a_bytes, out_bytes):
    """Double-buffered pipeline working set + scratch for one sage_conv call."""
    dbuf = 2 * (tm * tk * a_bytes            # A tile
                + tk * f_pad * 2             # X[k]
                + tm * f_pad * 2             # X[i]
                + tm * 4                     # inv_deg
                + 2 * f_pad * h_pad * 2      # W_self + W_neigh
                + h_pad * 4                  # bias
                + tm * h_pad * out_bytes)    # output block
    scratch = tm * f_pad * 4 + tm * h_pad * 4
    return dbuf + scratch


def _choose_tiles(n, tm, tk, f_pad, h_pad, a_bytes):
    """Pick large power-of-two x128 tiles, clamped to the graph and to a
    v7x-safe VMEM budget, keeping >= 2 row tiles so both TensorCores get work."""
    assert tm % 128 == 0 and tk % 128 == 0
    n128 = _round_up(n, 128)

    def shrink(t, cap):
        t = max(128, t)
        while t > cap and t > 128:
            t //= 2
        return t

    tk = shrink(tk, n128)
    tm = shrink(tm, n128)
    if n128 >= 256:                      # v7x megacore: keep the row grid >= 2
        tm = shrink(tm, n128 // 2)
    # Respect the VMEM budget (matters when F/H are large).  Shrink tk first:
    # shrinking tm would also increase the X re-stream factor.
    while _vmem_bytes(tm, tk, f_pad, h_pad, a_bytes, 4) > _VMEM_BUDGET_BYTES and tk > 128:
        tk = max(128, tk // 2)
    while _vmem_bytes(tm, tk, f_pad, h_pad, a_bytes, 4) > _VMEM_BUDGET_BYTES and tm > 128:
        tm = max(128, tm // 2)
    return tm, tk


def sage_conv(a, inv_deg, x, w_self, w_neigh, bias, *,
              apply_relu, out_dtype, tm, tk):
    """One SAGEConv layer via a tiled, pipelined Pallas call.

    a       : (Np, Np)  int8 {0,1} or bf16 weighted, UNnormalized adjacency (zero-padded)
    inv_deg : (Np, 1)   f32 1/deg_in (zero-padded)
    x       : (Np, Fp)  bf16 node features (zero-padded)
    w_self  : (Fp, Hp)  bf16
    w_neigh : (Fp, Hp)  bf16
    bias    : (1, Hp)   f32
    """
    n_pad, f_pad = x.shape
    h_pad = w_self.shape[1]
    assert a.shape == (n_pad, n_pad)
    assert w_self.shape == (f_pad, h_pad) and w_neigh.shape == (f_pad, h_pad)
    assert inv_deg.shape == (n_pad, 1) and bias.shape == (1, h_pad)
    assert n_pad % tm == 0 and n_pad % tk == 0
    assert tm % 128 == 0 and tk % 128 == 0
    assert f_pad % 128 == 0 and h_pad % 128 == 0

    grid = (n_pad // tm, n_pad // tk)
    a_bytes = jnp.dtype(a.dtype).itemsize
    out_bytes = jnp.dtype(out_dtype).itemsize

    flops = 2 * n_pad * n_pad * f_pad + 4 * n_pad * f_pad * h_pad
    bytes_accessed = (
        n_pad * n_pad * a_bytes                 # A streamed once (narrow dtype)
        + (n_pad // tm) * n_pad * f_pad * 2     # X[k] re-streamed per row tile
        + n_pad * f_pad * 2                     # X[i] self rows
        + n_pad * 4                             # inv_deg
        + 2 * f_pad * h_pad * 2 + h_pad * 4     # weights + bias
        + n_pad * h_pad * out_bytes             # output
    )

    kernel = functools.partial(_sage_layer_kernel, apply_relu=apply_relu)
    return pl.pallas_call(
        kernel,
        out_shape=jax.ShapeDtypeStruct((n_pad, h_pad), out_dtype),
        grid=grid,
        in_specs=[
            pl.BlockSpec((tm, tk), lambda i, k: (i, k)),        # A tile
            pl.BlockSpec((tk, f_pad), lambda i, k: (k, 0)),     # X[k] neighbor rows
            pl.BlockSpec((tm, f_pad), lambda i, k: (i, 0)),     # X[i] self rows
            pl.BlockSpec((tm, 1), lambda i, k: (i, 0)),         # 1/deg_in rows
            pl.BlockSpec((f_pad, h_pad), lambda i, k: (0, 0)),  # W_self
            pl.BlockSpec((f_pad, h_pad), lambda i, k: (0, 0)),  # W_neigh
            pl.BlockSpec((1, h_pad), lambda i, k: (0, 0)),      # bias
        ],
        out_specs=pl.BlockSpec((tm, h_pad), lambda i, k: (i, 0)),
        scratch_shapes=[
            pltpu.VMEM((tm, f_pad), jnp.float32),   # f32 neighbor-sum accumulator
            pltpu.VMEM((tm, h_pad), jnp.float32),   # hoisted x_i @ W_self + bias
        ],
        compiler_params=pltpu.CompilerParams(
            dimension_semantics=("parallel", "arbitrary"),
            vmem_limit_bytes=_VMEM_LIMIT_BYTES,
        ),
        cost_estimate=pl.CostEstimate(
            flops=flops, transcendentals=0, bytes_accessed=bytes_accessed),
    )(a, x, x, inv_deg, w_self, w_neigh, bias)


def graphsage_forward(adj, inv_deg, x, params, *, tm=512, tk=1024):
    """GraphSAGE.forward: relu(conv1(...)) -> conv2(...).

    adj     : (N, N) UNnormalized adjacency (int -> streamed as int8, float -> bf16)
    inv_deg : (N,)   f32 1 / max(in-degree count, 1)
    x       : (N, F) f32 node features
    """
    n, f = x.shape
    h_feats = params["w_self1"].shape[1]
    f_pad = _round_up(f, 128)
    h_pad = _round_up(h_feats, 128)

    # Narrow dtype for the dominant N^2 adjacency stream: exact int8 {0,1} for
    # unweighted graphs, bf16 for weighted ones.  Normalization stays in f32
    # inside the kernel so it never touches the narrow operand.
    a_dtype = (jnp.int8 if (jnp.issubdtype(adj.dtype, jnp.integer)
                            or adj.dtype == jnp.bool_) else jnp.bfloat16)

    tm, tk = _choose_tiles(n, tm, tk, f_pad, h_pad,
                           a_bytes=jnp.dtype(a_dtype).itemsize)
    n_pad = _round_up(n, math.lcm(tm, tk))

    a_p = _pad2d(adj.astype(a_dtype), n_pad, n_pad)
    inv_p = jnp.pad(inv_deg.astype(jnp.float32), (0, n_pad - n)).reshape(n_pad, 1)
    x_p = _pad2d(x, n_pad, f_pad).astype(jnp.bfloat16)

    ws1 = _pad2d(params["w_self1"], f_pad, h_pad).astype(jnp.bfloat16)
    wn1 = _pad2d(params["w_neigh1"], f_pad, h_pad).astype(jnp.bfloat16)
    b1 = jnp.pad(params["b1"], (0, h_pad - h_feats)).astype(jnp.float32).reshape(1, h_pad)
    ws2 = _pad2d(params["w_self2"], h_pad, h_pad).astype(jnp.bfloat16)
    wn2 = _pad2d(params["w_neigh2"], h_pad, h_pad).astype(jnp.bfloat16)
    b2 = jnp.pad(params["b2"], (0, h_pad - h_feats)).astype(jnp.float32).reshape(1, h_pad)

    # Layer 1 emits bf16 directly (halves h1 writeback, no extra cast before
    # layer 2); layer 2 emits f32.
    h1 = sage_conv(a_p, inv_p, x_p, ws1, wn1, b1,
                   apply_relu=True, out_dtype=jnp.bfloat16, tm=tm, tk=tk)
    h2 = sage_conv(a_p, inv_p, h1, ws2, wn2, b2,
                   apply_relu=False, out_dtype=jnp.float32, tm=tm, tk=tk)
    return h2[:n, :h_feats]


def build_graph(key, num_nodes, edge_prob=0.3, edge_weight=None):
    """Random directed graph.  Returns (adj, inv_deg).

    adj[i, j] = 1 (or w_ji) iff edge j -> i exists; int8 when unweighted.
    inv_deg   = 1 / max(#in-edges, 1) -- DGL 'mean' uses the unweighted count,
    computed before any edge_weight is applied.
    """
    mask = jax.random.uniform(key, (num_nodes, num_nodes)) < edge_prob
    mask = jnp.logical_and(mask, ~jnp.eye(num_nodes, dtype=bool))  # no self-loops
    deg_in = jnp.sum(mask, axis=1).astype(jnp.float32)
    inv_deg = 1.0 / jnp.maximum(deg_in, 1.0)
    if edge_weight is None:
        adj = mask.astype(jnp.int8)
    else:
        adj = mask.astype(jnp.float32) * edge_weight
    return adj, inv_deg


def init_params(key, in_feats, h_feats):
    ks = jax.random.split(key, 6)

    def xavier(k, fan_in, fan_out):
        lim = (6.0 / (fan_in + fan_out)) ** 0.5
        return jax.random.uniform(
            k, (fan_in, fan_out), minval=-lim, maxval=lim, dtype=jnp.float32)

    return {
        "w_self1": xavier(ks[0], in_feats, h_feats),
        "w_neigh1": xavier(ks[1], in_feats, h_feats),
        "b1": jnp.zeros((h_feats,), jnp.float32),
        "w_self2": xavier(ks[2], h_feats, h_feats),
        "w_neigh2": xavier(ks[3], h_feats, h_feats),
        "b2": jnp.zeros((h_feats,), jnp.float32),
    }


def graphsage_reference(adj, inv_deg, x, p):
    """Plain-JAX reference mirroring the kernel's bf16-stream / f32-accumulate math."""
    bf = lambda t: t.astype(jnp.bfloat16).astype(jnp.float32)
    a = adj.astype(jnp.bfloat16).astype(jnp.float32)   # exact for int8 {0,1}
    scale = inv_deg.astype(jnp.float32)[:, None]
    ws1, wn1 = bf(p["w_self1"]), bf(p["w_neigh1"])
    ws2, wn2 = bf(p["w_self2"]), bf(p["w_neigh2"])

    xq = bf(x)
    neigh1 = bf((a @ xq) * scale)                      # kernel casts acc*invdeg to bf16
    h = xq @ ws1 + neigh1 @ wn1 + p["b1"]
    h = jnp.maximum(h, 0.0)
    hq = bf(h)                                         # layer-1 output stored as bf16

    neigh2 = bf((a @ hq) * scale)
    out = hq @ ws2 + neigh2 @ wn2 + p["b2"]
    return out


if __name__ == "__main__":
    num_nodes = 300
    in_feats = 48
    h_feats = 64

    key = jax.random.PRNGKey(0)
    k_graph, k_feat, k_param = jax.random.split(key, 3)

    adj, inv_deg = build_graph(k_graph, num_nodes, edge_prob=0.3)
    x = jax.random.normal(k_feat, (num_nodes, in_feats), dtype=jnp.float32)
    params = init_params(k_param, in_feats, h_feats)

    # Defaults request large tiles (tm=512, tk=1024); _choose_tiles clamps them
    # to this small graph (-> tm=128, tk=256, grid (4, 2)) while keeping >= 2
    # row tiles for megacore and staying inside the VMEM budget.
    fwd = jax.jit(graphsage_forward)
    out = jax.block_until_ready(fwd(adj, inv_deg, x, params))

    ref = graphsage_reference(adj, inv_deg, x, params)
    assert out.shape == (num_nodes, h_feats)
    max_err = float(jnp.max(jnp.abs(out - ref)))
    assert jnp.allclose(out, ref, atol=1e-2, rtol=1e-2), (
        f"mismatch vs reference, max |err| = {max_err}")

    print("KERNEL_OK")
</pallas_src>

<mosaic_0001>
module attributes {stable_mosaic.version = 11 : i64} {
  func.func @_sage_layer_kernel(%arg0: i32, %arg1: i32, %arg2: memref<128x256xi8, #tpu.memory_space<vmem>>, %arg3: memref<256x128xbf16, #tpu.memory_space<vmem>>, %arg4: memref<128x128xbf16, #tpu.memory_space<vmem>>, %arg5: memref<128x1xf32, #tpu.memory_space<vmem>>, %arg6: memref<128x128xbf16, #tpu.memory_space<vmem>>, %arg7: memref<128x128xbf16, #tpu.memory_space<vmem>>, %arg8: memref<1x128xf32, #tpu.memory_space<vmem>>, %arg9: memref<128x128xf32, #tpu.memory_space<vmem>>, %arg10: memref<128x128xf32, #tpu.memory_space<vmem>>, %arg11: memref<128x128xf32, #tpu.memory_space<vmem>>) attributes {dimension_semantics = [#tpu.dimension_semantics<parallel>, #tpu.dimension_semantics<arbitrary>], iteration_bounds = array<i64: 4, 2>, scalar_prefetch = 0 : i64, scratch_operands = 2 : i64, tpu.core_type = #tpu.core_type<tc>, window_params = [{transform_indices = @transform_0, window_bounds = array<i64: 128, 256>}, {transform_indices = @transform_1, window_bounds = array<i64: 256, 128>}, {transform_indices = @transform_2, window_bounds = array<i64: 128, 128>}, {transform_indices = @transform_3, window_bounds = array<i64: 128, 1>}, {pipeline_mode = #tpu.pipeline_mode<synchronous>, transform_indices = @transform_4, window_bounds = array<i64: 128, 128>}, {pipeline_mode = #tpu.pipeline_mode<synchronous>, transform_indices = @transform_5, window_bounds = array<i64: 128, 128>}, {pipeline_mode = #tpu.pipeline_mode<synchronous>, transform_indices = @transform_6, window_bounds = array<i64: 1, 128>}, {transform_indices = @transform_7, window_bounds = array<i64: 128, 128>}]} {
    %c0 = arith.constant 0 : index
    %c0_0 = arith.constant 0 : index
    %0 = vector.load %arg2[%c0, %c0_0] : memref<128x256xi8, #tpu.memory_space<vmem>>, vector<128x256xi8>
    %1 = arith.sitofp %0 : vector<128x256xi8> to vector<128x256xbf16>
    %c0_1 = arith.constant 0 : index
    %c0_2 = arith.constant 0 : index
    %2 = vector.load %arg3[%c0_1, %c0_2] : memref<256x128xbf16, #tpu.memory_space<vmem>>, vector<256x128xbf16>
    %cst = arith.constant dense<0.000000e+00> : vector<128x128xf32>
    %3 = tpu.matmul %1, %2, %cst {dimension_numbers = #tpu.dot_dimension_numbers<[1], [0], [0], [1], [0, 0, 1, 1], [], []>} : vector<128x256xbf16>, vector<256x128xbf16>, vector<128x128xf32> -> vector<128x128xf32>
    %c0_i32 = arith.constant 0 : i32
    %4 = arith.cmpi eq, %arg1, %c0_i32 : i32
    %5 = arith.extui %4 : i1 to i32
    %c0_i32_3 = arith.constant 0 : i32
    %6 = arith.cmpi ne, %5, %c0_i32_3 : i32
    scf.if %6 {
      %c0_7 = arith.constant 0 : index
      %c0_8 = arith.constant 0 : index
      %13 = vector.load %arg10[%c0_7, %c0_8] : memref<128x128xf32, #tpu.memory_space<vmem>>, vector<128x128xf32>
      tpu.vector_store %arg10[%c0_7, %c0_8], %3 {strides = array<i32>} : memref<128x128xf32, #tpu.memory_space<vmem>>, vector<128x128xf32>,
      %c0_9 = arith.constant 0 : index
      %c0_10 = arith.constant 0 : index
      %14 = vector.load %arg4[%c0_9, %c0_10] : memref<128x128xbf16, #tpu.memory_space<vmem>>, vector<128x128xbf16>
      %c0_11 = arith.constant 0 : index
      %c0_12 = arith.constant 0 : index
      %15 = vector.load %arg6[%c0_11, %c0_12] : memref<128x128xbf16, #tpu.memory_space<vmem>>, vector<128x128xbf16>
      %cst_13 = arith.constant dense<0.000000e+00> : vector<128x128xf32>
      %16 = tpu.matmul %14, %15, %cst_13 {dimension_numbers = #tpu.dot_dimension_numbers<[1], [0], [0], [1], [0, 0, 1, 1], [], []>} : vector<128x128xbf16>, vector<128x128xbf16>, vector<128x128xf32> -> vector<128x128xf32>
      %c0_14 = arith.constant 0 : index
      %c0_15 = arith.constant 0 : index
      %17 = vector.load %arg8[%c0_14, %c0_15] : memref<1x128xf32, #tpu.memory_space<vmem>>, vector<1x128xf32>
      %18 = vector.broadcast %17 : vector<1x128xf32> to vector<128x128xf32>
      %19 = arith.addf %16, %18 : vector<128x128xf32>
      %c0_16 = arith.constant 0 : index
      %c0_17 = arith.constant 0 : index
      %20 = vector.load %arg11[%c0_16, %c0_17] : memref<128x128xf32, #tpu.memory_space<vmem>>, vector<128x128xf32>
      tpu.vector_store %arg11[%c0_16, %c0_17], %19 {strides = array<i32>} : memref<128x128xf32, #tpu.memory_space<vmem>>, vector<128x128xf32>,
    } else {
    }
    %c0_i32_4 = arith.constant 0 : i32
    %7 = arith.cmpi sgt, %arg1, %c0_i32_4 : i32
    %8 = arith.extui %7 : i1 to i32
    %c0_i32_5 = arith.constant 0 : i32
    %9 = arith.cmpi ne, %8, %c0_i32_5 : i32
    scf.if %9 {
      %c0_7 = arith.constant 0 : index
      %c0_8 = arith.constant 0 : index
      %13 = vector.load %arg10[%c0_7, %c0_8] : memref<128x128xf32, #tpu.memory_space<vmem>>, vector<128x128xf32>
      %14 = arith.addf %13, %3 : vector<128x128xf32>
      %c0_9 = arith.constant 0 : index
      %c0_10 = arith.constant 0 : index
      %15 = vector.load %arg10[%c0_9, %c0_10] : memref<128x128xf32, #tpu.memory_space<vmem>>, vector<128x128xf32>
      tpu.vector_store %arg10[%c0_9, %c0_10], %14 {strides = array<i32>} : memref<128x128xf32, #tpu.memory_space<vmem>>, vector<128x128xf32>,
    } else {
    }
    %c1_i32 = arith.constant 1 : i32
    %10 = arith.cmpi eq, %arg1, %c1_i32 : i32
    %11 = arith.extui %10 : i1 to i32
    %c0_i32_6 = arith.constant 0 : i32
    %12 = arith.cmpi ne, %11, %c0_i32_6 : i32
    scf.if %12 {
      %c0_7 = arith.constant 0 : index
      %c0_8 = arith.constant 0 : index
      %13 = vector.load %arg10[%c0_7, %c0_8] : memref<128x128xf32, #tpu.memory_space<vmem>>, vector<128x128xf32>
      %c0_9 = arith.constant 0 : index
      %c0_10 = arith.constant 0 : index
      %14 = vector.load %arg5[%c0_9, %c0_10] : memref<128x1xf32, #tpu.memory_space<vmem>>, vector<128x1xf32>
      %15 = vector.broadcast %14 : vector<128x1xf32> to vector<128x128xf32>
      %16 = arith.mulf %13, %15 : vector<128x128xf32>
      %17 = arith.truncf %16 : vector<128x128xf32> to vector<128x128xbf16>
      %c0_11 = arith.constant 0 : index
      %c0_12 = arith.constant 0 : index
      %18 = vector.load %arg11[%c0_11, %c0_12] : memref<128x128xf32, #tpu.memory_space<vmem>>, vector<128x128xf32>
      %c0_13 = arith.constant 0 : index
      %c0_14 = arith.constant 0 : index
      %19 = vector.load %arg7[%c0_13, %c0_14] : memref<128x128xbf16, #tpu.memory_space<vmem>>, vector<128x128xbf16>
      %cst_15 = arith.constant dense<0.000000e+00> : vector<128x128xf32>
      %20 = tpu.matmul %17, %19, %cst_15 {dimension_numbers = #tpu.dot_dimension_numbers<[1], [0], [0], [1], [0, 0, 1, 1], [], []>} : vector<128x128xbf16>, vector<128x128xbf16>, vector<128x128xf32> -> vector<128x128xf32>
      %21 = arith.addf %18, %20 : vector<128x128xf32>
      %c0_16 = arith.constant 0 : index
      %c0_17 = arith.constant 0 : index
      %22 = vector.load %arg9[%c0_16, %c0_17] : memref<128x128xf32, #tpu.memory_space<vmem>>, vector<128x128xf32>
      tpu.vector_store %arg9[%c0_16, %c0_17], %21 {strides = array<i32>} : memref<128x128xf32, #tpu.memory_space<vmem>>, vector<128x128xf32>,
    } else {
    }
    return
  }
  func.func @transform_0(%arg0: i32, %arg1: i32) -> (i32, i32) {
    %c0_i32 = arith.constant 0 : i32
    return %arg0, %arg1 : i32, i32
  }
  func.func @transform_1(%arg0: i32, %arg1: i32) -> (i32, i32) {
    %c0_i32 = arith.constant 0 : i32
    %c0_i32_0 = arith.constant 0 : i32
    return %arg1, %c0_i32 : i32, i32
  }
  func.func @transform_2(%arg0: i32, %arg1: i32) -> (i32, i32) {
    %c0_i32 = arith.constant 0 : i32
    %c0_i32_0 = arith.constant 0 : i32
    return %arg0, %c0_i32 : i32, i32
  }
  func.func @transform_3(%arg0: i32, %arg1: i32) -> (i32, i32) {
    %c0_i32 = arith.constant 0 : i32
    %c0_i32_0 = arith.constant 0 : i32
    return %arg0, %c0_i32 : i32, i32
  }
  func.func @transform_4(%arg0: i32, %arg1: i32) -> (i32, i32) {
    %c0_i32 = arith.constant 0 : i32
    %c0_i32_0 = arith.constant 0 : i32
    %c0_i32_1 = arith.constant 0 : i32
    return %c0_i32, %c0_i32_0 : i32, i32
  }
  func.func @transform_5(%arg0: i32, %arg1: i32) -> (i32, i32) {
    %c0_i32 = arith.constant 0 : i32
    %c0_i32_0 = arith.constant 0 : i32
    %c0_i32_1 = arith.constant 0 : i32
    return %c0_i32, %c0_i32_0 : i32, i32
  }
  func.func @transform_6(%arg0: i32, %arg1: i32) -> (i32, i32) {
    %c0_i32 = arith.constant 0 : i32
    %c0_i32_0 = arith.constant 0 : i32
    %c0_i32_1 = arith.constant 0 : i32
    return %c0_i32, %c0_i32_0 : i32, i32
  }
  func.func @transform_7(%arg0: i32, %arg1: i32) -> (i32, i32) {
    %c0_i32 = arith.constant 0 : i32
    %c0_i32_0 = arith.constant 0 : i32
    return %arg0, %c0_i32 : i32, i32
  }
}

module attributes {stable_mosaic.version = 11 : i64} {
  func.func @_sage_layer_kernel(%arg0: i32, %arg1: i32, %arg2: memref<128x256xi8, #tpu.memory_space<vmem>>, %arg3: memref<256x128xbf16, #tpu.memory_space<vmem>>, %arg4: memref<128x128xbf16, #tpu.memory_space<vmem>>, %arg5: memref<128x1xf32, #tpu.memory_space<vmem>>, %arg6: memref<128x128xbf16, #tpu.memory_space<vmem>>, %arg7: memref<128x128xbf16, #tpu.memory_space<vmem>>, %arg8: memref<1x128xf32, #tpu.memory_space<vmem>>, %arg9: memref<128x128xbf16, #tpu.memory_space<vmem>>, %arg10: memref<128x128xf32, #tpu.memory_space<vmem>>, %arg11: memref<128x128xf32, #tpu.memory_space<vmem>>) attributes {dimension_semantics = [#tpu.dimension_semantics<parallel>, #tpu.dimension_semantics<arbitrary>], iteration_bounds = array<i64: 4, 2>, scalar_prefetch = 0 : i64, scratch_operands = 2 : i64, tpu.core_type = #tpu.core_type<tc>, window_params = [{transform_indices = @transform_0, window_bounds = array<i64: 128, 256>}, {transform_indices = @transform_1, window_bounds = array<i64: 256, 128>}, {transform_indices = @transform_2, window_bounds = array<i64: 128, 128>}, {transform_indices = @transform_3, window_bounds = array<i64: 128, 1>}, {pipeline_mode = #tpu.pipeline_mode<synchronous>, transform_indices = @transform_4, window_bounds = array<i64: 128, 128>}, {pipeline_mode = #tpu.pipeline_mode<synchronous>, transform_indices = @transform_5, window_bounds = array<i64: 128, 128>}, {pipeline_mode = #tpu.pipeline_mode<synchronous>, transform_indices = @transform_6, window_bounds = array<i64: 1, 128>}, {transform_indices = @transform_7, window_bounds = array<i64: 128, 128>}]} {
    %c0 = arith.constant 0 : index
    %c0_0 = arith.constant 0 : index
    %0 = vector.load %arg2[%c0, %c0_0] : memref<128x256xi8, #tpu.memory_space<vmem>>, vector<128x256xi8>
    %1 = arith.sitofp %0 : vector<128x256xi8> to vector<128x256xbf16>
    %c0_1 = arith.constant 0 : index
    %c0_2 = arith.constant 0 : index
    %2 = vector.load %arg3[%c0_1, %c0_2] : memref<256x128xbf16, #tpu.memory_space<vmem>>, vector<256x128xbf16>
    %cst = arith.constant dense<0.000000e+00> : vector<128x128xf32>
    %3 = tpu.matmul %1, %2, %cst {dimension_numbers = #tpu.dot_dimension_numbers<[1], [0], [0], [1], [0, 0, 1, 1], [], []>} : vector<128x256xbf16>, vector<256x128xbf16>, vector<128x128xf32> -> vector<128x128xf32>
    %c0_i32 = arith.constant 0 : i32
    %4 = arith.cmpi eq, %arg1, %c0_i32 : i32
    %5 = arith.extui %4 : i1 to i32
    %c0_i32_3 = arith.constant 0 : i32
    %6 = arith.cmpi ne, %5, %c0_i32_3 : i32
    scf.if %6 {
      %c0_7 = arith.constant 0 : index
      %c0_8 = arith.constant 0 : index
      %13 = vector.load %arg10[%c0_7, %c0_8] : memref<128x128xf32, #tpu.memory_space<vmem>>, vector<128x128xf32>
      tpu.vector_store %arg10[%c0_7, %c0_8], %3 {strides = array<i32>} : memref<128x128xf32, #tpu.memory_space<vmem>>, vector<128x128xf32>,
      %c0_9 = arith.constant 0 : index
      %c0_10 = arith.constant 0 : index
      %14 = vector.load %arg4[%c0_9, %c0_10] : memref<128x128xbf16, #tpu.memory_space<vmem>>, vector<128x128xbf16>
      %c0_11 = arith.constant 0 : index
      %c0_12 = arith.constant 0 : index
      %15 = vector.load %arg6[%c0_11, %c0_12] : memref<128x128xbf16, #tpu.memory_space<vmem>>, vector<128x128xbf16>
      %cst_13 = arith.constant dense<0.000000e+00> : vector<128x128xf32>
      %16 = tpu.matmul %14, %15, %cst_13 {dimension_numbers = #tpu.dot_dimension_numbers<[1], [0], [0], [1], [0, 0, 1, 1], [], []>} : vector<128x128xbf16>, vector<128x128xbf16>, vector<128x128xf32> -> vector<128x128xf32>
      %c0_14 = arith.constant 0 : index
      %c0_15 = arith.constant 0 : index
      %17 = vector.load %arg8[%c0_14, %c0_15] : memref<1x128xf32, #tpu.memory_space<vmem>>, vector<1x128xf32>
      %18 = vector.broadcast %17 : vector<1x128xf32> to vector<128x128xf32>
      %19 = arith.addf %16, %18 : vector<128x128xf32>
      %c0_16 = arith.constant 0 : index
      %c0_17 = arith.constant 0 : index
      %20 = vector.load %arg11[%c0_16, %c0_17] : memref<128x128xf32, #tpu.memory_space<vmem>>, vector<128x128xf32>
      tpu.vector_store %arg11[%c0_16, %c0_17], %19 {strides = array<i32>} : memref<128x128xf32, #tpu.memory_space<vmem>>, vector<128x128xf32>,
    } else {
    }
    %c0_i32_4 = arith.constant 0 : i32
    %7 = arith.cmpi sgt, %arg1, %c0_i32_4 : i32
    %8 = arith.extui %7 : i1 to i32
    %c0_i32_5 = arith.constant 0 : i32
    %9 = arith.cmpi ne, %8, %c0_i32_5 : i32
    scf.if %9 {
      %c0_7 = arith.constant 0 : index
      %c0_8 = arith.constant 0 : index
      %13 = vector.load %arg10[%c0_7, %c0_8] : memref<128x128xf32, #tpu.memory_space<vmem>>, vector<128x128xf32>
      %14 = arith.addf %13, %3 : vector<128x128xf32>
      %c0_9 = arith.constant 0 : index
      %c0_10 = arith.constant 0 : index
      %15 = vector.load %arg10[%c0_9, %c0_10] : memref<128x128xf32, #tpu.memory_space<vmem>>, vector<128x128xf32>
      tpu.vector_store %arg10[%c0_9, %c0_10], %14 {strides = array<i32>} : memref<128x128xf32, #tpu.memory_space<vmem>>, vector<128x128xf32>,
    } else {
    }
    %c1_i32 = arith.constant 1 : i32
    %10 = arith.cmpi eq, %arg1, %c1_i32 : i32
    %11 = arith.extui %10 : i1 to i32
    %c0_i32_6 = arith.constant 0 : i32
    %12 = arith.cmpi ne, %11, %c0_i32_6 : i32
    scf.if %12 {
      %c0_7 = arith.constant 0 : index
      %c0_8 = arith.constant 0 : index
      %13 = vector.load %arg10[%c0_7, %c0_8] : memref<128x128xf32, #tpu.memory_space<vmem>>, vector<128x128xf32>
      %c0_9 = arith.constant 0 : index
      %c0_10 = arith.constant 0 : index
      %14 = vector.load %arg5[%c0_9, %c0_10] : memref<128x1xf32, #tpu.memory_space<vmem>>, vector<128x1xf32>
      %15 = vector.broadcast %14 : vector<128x1xf32> to vector<128x128xf32>
      %16 = arith.mulf %13, %15 : vector<128x128xf32>
      %17 = arith.truncf %16 : vector<128x128xf32> to vector<128x128xbf16>
      %c0_11 = arith.constant 0 : index
      %c0_12 = arith.constant 0 : index
      %18 = vector.load %arg11[%c0_11, %c0_12] : memref<128x128xf32, #tpu.memory_space<vmem>>, vector<128x128xf32>
      %c0_13 = arith.constant 0 : index
      %c0_14 = arith.constant 0 : index
      %19 = vector.load %arg7[%c0_13, %c0_14] : memref<128x128xbf16, #tpu.memory_space<vmem>>, vector<128x128xbf16>
      %cst_15 = arith.constant dense<0.000000e+00> : vector<128x128xf32>
      %20 = tpu.matmul %17, %19, %cst_15 {dimension_numbers = #tpu.dot_dimension_numbers<[1], [0], [0], [1], [0, 0, 1, 1], [], []>} : vector<128x128xbf16>, vector<128x128xbf16>, vector<128x128xf32> -> vector<128x128xf32>
      %21 = arith.addf %18, %20 : vector<128x128xf32>
      %cst_16 = arith.constant 0.000000e+00 : f32
      %22 = vector.broadcast %cst_16 : f32 to vector<128x128xf32>
      %23 = arith.maximumf %21, %22 : vector<128x128xf32>
      %24 = arith.truncf %23 : vector<128x128xf32> to vector<128x128xbf16>
      %c0_17 = arith.constant 0 : index
      %c0_18 = arith.constant 0 : index
      %25 = vector.load %arg9[%c0_17, %c0_18] : memref<128x128xbf16, #tpu.memory_space<vmem>>, vector<128x128xbf16>
      tpu.vector_store %arg9[%c0_17, %c0_18], %24 {strides = array<i32>} : memref<128x128xbf16, #tpu.memory_space<vmem>>, vector<128x128xbf16>,
    } else {
    }
    return
  }
  func.func @transform_0(%arg0: i32, %arg1: i32) -> (i32, i32) {
    %c0_i32 = arith.constant 0 : i32
    return %arg0, %arg1 : i32, i32
  }
  func.func @transform_1(%arg0: i32, %arg1: i32) -> (i32, i32) {
    %c0_i32 = arith.constant 0 : i32
    %c0_i32_0 = arith.constant 0 : i32
    return %arg1, %c0_i32 : i32, i32
  }
  func.func @transform_2(%arg0: i32, %arg1: i32) -> (i32, i32) {
    %c0_i32 = arith.constant 0 : i32
    %c0_i32_0 = arith.constant 0 : i32
    return %arg0, %c0_i32 : i32, i32
  }
  func.func @transform_3(%arg0: i32, %arg1: i32) -> (i32, i32) {
    %c0_i32 = arith.constant 0 : i32
    %c0_i32_0 = arith.constant 0 : i32
    return %arg0, %c0_i32 : i32, i32
  }
  func.func @transform_4(%arg0: i32, %arg1: i32) -> (i32, i32) {
    %c0_i32 = arith.constant 0 : i32
    %c0_i32_0 = arith.constant 0 : i32
    %c0_i32_1 = arith.constant 0 : i32
    return %c0_i32, %c0_i32_0 : i32, i32
  }
  func.func @transform_5(%arg0: i32, %arg1: i32) -> (i32, i32) {
    %c0_i32 = arith.constant 0 : i32
    %c0_i32_0 = arith.constant 0 : i32
    %c0_i32_1 = arith.constant 0 : i32
    return %c0_i32, %c0_i32_0 : i32, i32
  }
  func.func @transform_6(%arg0: i32, %arg1: i32) -> (i32, i32) {
    %c0_i32 = arith.constant 0 : i32
    %c0_i32_0 = arith.constant 0 : i32
    %c0_i32_1 = arith.constant 0 : i32
    return %c0_i32, %c0_i32_0 : i32, i32
  }
  func.func @transform_7(%arg0: i32, %arg1: i32) -> (i32, i32) {
    %c0_i32 = arith.constant 0 : i32
    %c0_i32_0 = arith.constant 0 : i32
    return %arg0, %c0_i32 : i32, i32
  }
}

</mosaic_0001>

<llo_original>
// kernel: graphsage_forward.3
$region0: #{graphsage_forward.3}
  #allocation0 [shape = 'u32[]', space=smem, size = 0x4, offset = 0x4, fixed_abs, tag = 'smem constant byte address 0x4 - core index']
  #allocation1 [shape = 'u32[144,128]{1,0:T(1,128)}', space=vmem, size = 0x12000, scoped, tag = 'internal scratch']
  #allocation2 [shape = 'f32[128,128]{1,0:T(8,128)}', space=vmem, size = 0x10000, scoped, tag = 'scratch operand']
  #allocation3 [shape = 'f32[128,128]{1,0:T(8,128)}', space=vmem, size = 0x10000, scoped, tag = 'scratch operand']
  %s0 = inlined_call_operand.vmem [shape: s8[512,512], index: 0, kind: input, shape index: {}]
  %s1 = inlined_call_operand.vmem [shape: bf16[512,128], index: 1, kind: input, shape index: {}, may-alias: {1,2}]
  %s2 = inlined_call_operand.vmem [shape: bf16[512,128], index: 2, kind: input, shape index: {}, may-alias: {1,2}]
  %s3 = inlined_call_operand.vmem [shape: f32[512,1], index: 3, kind: input, shape index: {}]
  %s4 = inlined_call_operand.vmem [shape: bf16[128,128], index: 4, kind: input, shape index: {}]
  %s5 = inlined_call_operand.vmem [shape: bf16[128,128], index: 5, kind: input, shape index: {}]
  %s6 = inlined_call_operand.vmem [shape: f32[1,128], index: 6, kind: input, shape index: {}]
  %s7 = inlined_call_operand.vmem [shape: f32[512,128], index: 7, kind: output, shape index: {}]
  %s8 = sld [smem:[#allocation0]]
  $region96: #{graphsage_forward.3} parent=0
    _
  %s10 = ssub.s32 1, %s8
  %s11 = scalar_select 0, %s10, %s8
  $region1: #{graphsage_forward.3} parent=0
    #allocation4 [shape = 'u8[65536]{0}', space=vmem, size = 0x10000, scoped, tag = 'input window, operand 0']
    loop: start=0, step=1, limit=10
    $region2: #{graphsage_forward.3} parent=1 // loop_pre_header
      _
    $region3: #{graphsage_forward.3} parent=1 // loop_header
      %s13 = sphi 0, %s17
      %p14 = scmp.ge.s32.totalorder %s13, 10
      %s20 = sphi 0, %s32
      %s21 = sphi 0, %s28
      %s22 = sphi 0, %s20
      %s23 = sphi 0, %s21
      %s24 = sphi 0, %s22
      %s25 = sphi 0, %s23
      %s37 = sphi 0, %s39
      %s40 = sphi 0, %s37
      %s41 = sphi 0, %s40
      %s57 = sphi 0, %s41
      %s63 = sphi 0, %s65
      %s66 = sphi 0, %s63
      %s67 = sphi 0, %s66
      %s83 = sphi 0, %s67
      %s89 = sphi 0, %s91
      %s92 = sphi 0, %s89
      %s93 = sphi 0, %s92
      %s109 = sphi 0, %s93
      %s115 = sphi 0, %s117
      %s118 = sphi 0, %s115
      %s119 = sphi 0, %s118
      %s135 = sphi 0, %s119
      %s139 = sphi 0, %s139
      %s141 = sphi 0, %s139
      %s142 = sphi 0, %s141
      %s156 = sphi 0, %s142
      %s160 = sphi 0, %s160
      %s162 = sphi 0, %s160
      %s163 = sphi 0, %s162
      %s177 = sphi 0, %s163
      %s181 = sphi 0, %s181
      %s183 = sphi 0, %s181
      %s184 = sphi 0, %s183
      %s198 = sphi 0, %s184
      %s204 = sphi 0, %s206
      %s207 = sphi 0, %s204
      %s208 = sphi 0, %s207
      %s224 = sphi 0, %s208
    $region4: #{graphsage_forward.3} parent=1 // loop_header_branch
      %16 = sbr.rel (%p14) target = $region8
    $region5: #{graphsage_forward.3} parent=1 // loop_body
      %s18 = ssub.s32 %s13, 1
      %s19 = ssub.s32 %s13, 2
      %s26 = sadd.s32 1, %s21
      %p27 = scmp.ge.s32.totalorder %s26, 2
      %s28 = scalar_select %p27, 0, %s26
      %s29 = sadd.s32 1, %s20
      %s30 = scalar_select %p27, %s29, %s20
      %p31 = scmp.ge.s32.totalorder %s30, 4
      %s32 = scalar_select %p31, 0, %s30
      %s33 = ssub.s32 %s20, %s32
      %s34 = ssub.s32 %s21, %s28
      %s35 = sor.u32 %s33, %s34
      %p36 = scmp.eq.s32.totalorder %s35, 0
      %s38 = sadd.s32 %s37, 1
      %s39 = scalar_select %p36, %s37, %s38
      %p42 = pneg %p36
      %p43 = scmp.eq.s32.totalorder %s13, 7
      %p44 = por %p42, %p43
      %p45 = scmp.ne.s32.totalorder %s37, %s40
      %p46 = scmp.eq.s32.totalorder %s13, 0
      %p47 = por %p45, %p46
      %p48 = scmp.ne.s32.totalorder %s37, %s40
      %p49 = scmp.eq.s32.totalorder %s18, 7
      %p50 = por %p48, %p49
      %p51 = scmp.ne.s32.totalorder %s40, %s41
      %p52 = scmp.eq.s32.totalorder %s18, 0
      %p53 = por %p51, %p52
      %p54 = scmp.ne.s32.totalorder %s40, %s41
      %p55 = scmp.eq.s32.totalorder %s19, 7
      %p56 = por %p54, %p55
      %p58 = scmp.ne.s32.totalorder %s41, %s57
      %p59 = scmp.eq.s32.totalorder %s19, 0
      %p60 = por %p58, %p59
      %s61 = ssub.s32 %s21, %s28
      %p62 = scmp.eq.s32.totalorder %s61, 0
      %s64 = sadd.s32 %s63, 1
      %s65 = scalar_select %p62, %s63, %s64
      %p68 = pneg %p62
      %p69 = scmp.eq.s32.totalorder %s13, 7
      %p70 = por %p68, %p69
      %p71 = scmp.ne.s32.totalorder %s63, %s66
      %p72 = scmp.eq.s32.totalorder %s13, 0
      %p73 = por %p71, %p72
      %p74 = scmp.ne.s32.totalorder %s63, %s66
      %p75 = scmp.eq.s32.totalorder %s18, 7
      %p76 = por %p74, %p75
      %p77 = scmp.ne.s32.totalorder %s66, %s67
      %p78 = scmp.eq.s32.totalorder %s18, 0
      %p79 = por %p77, %p78
      %p80 = scmp.ne.s32.totalorder %s66, %s67
      %p81 = scmp.eq.s32.totalorder %s19, 7
      %p82 = por %p80, %p81
      %p84 = scmp.ne.s32.totalorder %s67, %s83
      %p85 = scmp.eq.s32.totalorder %s19, 0
      %p86 = por %p84, %p85
      %s87 = ssub.s32 %s20, %s32
      %p88 = scmp.eq.s32.totalorder %s87, 0
      %s90 = sadd.s32 %s89, 1
      %s91 = scalar_select %p88, %s89, %s90
      %p94 = pneg %p88
      %p95 = scmp.eq.s32.totalorder %s13, 7
      %p96 = por %p94, %p95
      %p97 = scmp.ne.s32.totalorder %s89, %s92
      %p98 = scmp.eq.s32.totalorder %s13, 0
      %p99 = por %p97, %p98
      %p100 = scmp.ne.s32.totalorder %s89, %s92
      %p101 = scmp.eq.s32.totalorder %s18, 7
      %p102 = por %p100, %p101
      %p103 = scmp.ne.s32.totalorder %s92, %s93
      %p104 = scmp.eq.s32.totalorder %s18, 0
      %p105 = por %p103, %p104
      %p106 = scmp.ne.s32.totalorder %s92, %s93
      %p107 = scmp.eq.s32.totalorder %s19, 7
      %p108 = por %p106, %p107
      %p110 = scmp.ne.s32.totalorder %s93, %s109
      %p111 = scmp.eq.s32.totalorder %s19, 0
      %p112 = por %p110, %p111
      %s113 = ssub.s32 %s20, %s32
      %p114 = scmp.eq.s32.totalorder %s113, 0
      %s116 = sadd.s32 %s115, 1
      %s117 = scalar_select %p114, %s115, %s116
      %p120 = pneg %p114
      %p121 = scmp.eq.s32.totalorder %s13, 7
      %p122 = por %p120, %p121
      %p123 = scmp.ne.s32.totalorder %s115, %s118
      %p124 = scmp.eq.s32.totalorder %s13, 0
      %p125 = por %p123, %p124
      %p126 = scmp.ne.s32.totalorder %s115, %s118
      %p127 = scmp.eq.s32.totalorder %s18, 7
      %p128 = por %p126, %p127
      %p129 = scmp.ne.s32.totalorder %s118, %s119
      %p130 = scmp.eq.s32.totalorder %s18, 0
      %p131 = por %p129, %p130
      %p132 = scmp.ne.s32.totalorder %s118, %s119
      %p133 = scmp.eq.s32.totalorder %s19, 7
      %p134 = por %p132, %p133
      %p136 = scmp.ne.s32.totalorder %s119, %s135
      %p137 = scmp.eq.s32.totalorder %s19, 0
      %p138 = por %p136, %p137
      %s140 = sadd.s32 %s139, 1
      %p143 = scmp.eq.s32.totalorder %s13, 7
      %p144 = scmp.ne.s32.totalorder %s139, %s141
      %p145 = scmp.eq.s32.totalorder %s13, 0
      %p146 = por %p144, %p145
      %p147 = scmp.ne.s32.totalorder %s139, %s141
      %p148 = scmp.eq.s32.totalorder %s18, 7
      %p149 = por %p147, %p148
      %p150 = scmp.ne.s32.totalorder %s141, %s142
      %p151 = scmp.eq.s32.totalorder %s18, 0
      %p152 = por %p150, %p151
      %p153 = scmp.ne.s32.totalorder %s141, %s142
      %p154 = scmp.eq.s32.totalorder %s19, 7
      %p155 = por %p153, %p154
      %p157 = scmp.ne.s32.totalorder %s142, %s156
      %p158 = scmp.eq.s32.totalorder %s19, 0
      %p159 = por %p157, %p158
      %s161 = sadd.s32 %s160, 1
      %p164 = scmp.eq.s32.totalorder %s13, 7
      %p165 = scmp.ne.s32.totalorder %s160, %s162
      %p166 = scmp.eq.s32.totalorder %s13, 0
      %p167 = por %p165, %p166
      %p168 = scmp.ne.s32.totalorder %s160, %s162
      %p169 = scmp.eq.s32.totalorder %s18, 7
      %p170 = por %p168, %p169
      %p171 = scmp.ne.s32.totalorder %s162, %s163
      %p172 = scmp.eq.s32.totalorder %s18, 0
      %p173 = por %p171, %p172
      %p174 = scmp.ne.s32.totalorder %s162, %s163
      %p175 = scmp.eq.s32.totalorder %s19, 7
      %p176 = por %p174, %p175
      %p178 = scmp.ne.s32.totalorder %s163, %s177
      %p179 = scmp.eq.s32.totalorder %s19, 0
      %p180 = por %p178, %p179
      %s182 = sadd.s32 %s181, 1
      %p185 = scmp.eq.s32.totalorder %s13, 7
      %p186 = scmp.ne.s32.totalorder %s181, %s183
      %p187 = scmp.eq.s32.totalorder %s13, 0
      %p188 = por %p186, %p187
      %p189 = scmp.ne.s32.totalorder %s181, %s183
      %p190 = scmp.eq.s32.totalorder %s18, 7
      %p191 = por %p189, %p190
      %p192 = scmp.ne.s32.totalorder %s183, %s184
      %p193 = scmp.eq.s32.totalorder %s18, 0
      %p194 = por %p192, %p193
      %p195 = scmp.ne.s32.totalorder %s183, %s184
      %p196 = scmp.eq.s32.totalorder %s19, 7
      %p197 = por %p195, %p196
      %p199 = scmp.ne.s32.totalorder %s184, %s198
      %p200 = scmp.eq.s32.totalorder %s19, 0
      %p201 = por %p199, %p200
      %s202 = ssub.s32 %s20, %s32
      %p203 = scmp.eq.s32.totalorder %s202, 0
      %s205 = sadd.s32 %s204, 1
      %s206 = scalar_select %p203, %s204, %s205
      %p209 = pneg %p203
      %p210 = scmp.eq.s32.totalorder %s13, 7
      %p211 = por %p209, %p210
      %p212 = scmp.ne.s32.totalorder %s204, %s207
      %p213 = scmp.eq.s32.totalorder %s13, 0
      %p214 = por %p212, %p213
      %p215 = scmp.ne.s32.totalorder %s204, %s207
      %p216 = scmp.eq.s32.totalorder %s18, 7
      %p217 = por %p215, %p216
      %p218 = scmp.ne.s32.totalorder %s207, %s208
      %p219 = scmp.eq.s32.totalorder %s18, 0
      %p220 = por %p218, %p219
      %p221 = scmp.ne.s32.totalorder %s207, %s208
      %p222 = scmp.eq.s32.totalorder %s19, 7
      %p223 = por %p221, %p222
      %p225 = scmp.ne.s32.totalorder %s208, %s224
      %p226 = scmp.eq.s32.totalorder %s19, 0
      %p227 = por %p225, %p226
      %p228 = scmp.le.s32.totalorder 1, %s13
      %p229 = scmp.lt.s32.totalorder %s13, 9
      %p230 = pnand %p228, %p229
      %p231 = pneg %p230
      // Predicated region
      $region9: #{graphsage_forward.3} parent=5 // pred_check
        _
      $region10: #{graphsage_forward.3} parent=5 // pred_check_branch
        %233 = sbr.rel (%p230) target = $region12
      $region11: #{graphsage_forward.3} parent=5 // pred_region
        %s234 = ssub.s32 %s13, 1
        // Predicated region
        $region13: #{graphsage_forward.3} parent=11 // pred_check
          %p235 = pneg %p152
        $region14: #{graphsage_forward.3} parent=11 // pred_check_branch
          %237 = sbr.rel (%p235) target = $region16
        $region15: #{graphsage_forward.3} parent=11 // pred_region
          _
        $region16: #{graphsage_forward.3} parent=11 // pred_fallthru
          _
        // Predicated region
        $region17: #{graphsage_forward.3} parent=11 // pred_check
          %p238 = pneg %p173
        $region18: #{graphsage_forward.3} parent=11 // pred_check_branch
          %240 = sbr.rel (%p238) target = $region20
        $region19: #{graphsage_forward.3} parent=11 // pred_region
          _
        $region20: #{graphsage_forward.3} parent=11 // pred_fallthru
          _
        // Predicated region
        $region21: #{graphsage_forward.3} parent=11 // pred_check
          %p241 = pneg %p194
        $region22: #{graphsage_forward.3} parent=11 // pred_check_branch
          %243 = sbr.rel (%p241) target = $region24
        $region23: #{graphsage_forward.3} parent=11 // pred_region
          _
        $region24: #{graphsage_forward.3} parent=11 // pred_fallthru
          _
      $region12: #{graphsage_forward.3} parent=5 // pred_fallthru
        _
      %p244 = scmp.lt.s32.totalorder %s13, 8
      // Predicated region
      $region25: #{graphsage_forward.3} parent=5 // pred_check
        %p245 = pneg %p244
      $region26: #{graphsage_forward.3} parent=5 // pred_check_branch
        %247 = sbr.rel (%p245) target = $region28
      $region27: #{graphsage_forward.3} parent=5 // pred_region
        // Predicated region
        $region29: #{graphsage_forward.3} parent=27 // pred_check
          %p248 = pneg %p47
        $region30: #{graphsage_forward.3} parent=27 // pred_check_branch
          %250 = sbr.rel (%p248) target = $region32
        $region31: #{graphsage_forward.3} parent=27 // pred_region
          %s251 = sand.u32 %s37, 1
          %s252 = sand.u32 %s37, 1
          %s253 = smul.addr %s252, 64
          %s254 = scalar_lea.vmem [#allocation4], %s253
          %s255 = smul.u32 4, %s20
          %s256 = smul.u32 2, %s21
          %s257 = smul.addr %s255, 4
          %s258 = sadd.s32 %s256, %s257
          %s259 = smul.addr %s258, 8
          %s260 = scalar_lea.vmem %s0, %s259
          // Predicated region
          $region33: #{graphsage_forward.3} parent=31 // pred_check
            _
          $region34: #{graphsage_forward.3} parent=31 // pred_check_branch
            %262 = sbr.rel (0) target = $region36
          $region35: #{graphsage_forward.3} parent=31 // pred_region
            // Predicated region
            $region37: #{graphsage_forward.3} parent=35 // pred_check
              _
            $region38: #{graphsage_forward.3} parent=35 // pred_check_branch
              %264 = sbr.rel (0) target = $region40
            $region39: #{graphsage_forward.3} parent=35 // pred_region
              loop: start=0, step=1, limit=1
              $region41: #{graphsage_forward.3} parent=39 // loop_pre_header
                _
              $region42: #{graphsage_forward.3} parent=39 // loop_header
                %s266 = sphi 0, %s270
                %p267 = scmp.ge.s32.totalorder %s266, 1
                %s271 = sphi %s260, %s260
                %s272 = sphi %s254, %s254
              $region43: #{graphsage_forward.3} parent=39 // loop_header_branch
                %269 = sbr.rel (%p267) target = $region47
              $region44: #{graphsage_forward.3} parent=39 // loop_body
                %v273 = vld [vmem:[%s271] sm:$0xff]
                %274 = vst [vmem:[%s272] sm:$0xff] %v273
                %v275 = vld [vmem:[%s271 + $0x8] sm:$0xff]
                %276 = vst [vmem:[%s272 + $0x8] sm:$0xff] %v275
                %v277 = vld [vmem:[%s271 + $0x20] sm:$0xff]
                %278 = vst [vmem:[%s272 + $0x10] sm:$0xff] %v277
                %v279 = vld [vmem:[%s271 + $0x28] sm:$0xff]
                %280 = vst [vmem:[%s272 + $0x18] sm:$0xff] %v279
                %v281 = vld [vmem:[%s271 + $0x40] sm:$0xff]
                %282 = vst [vmem:[%s272 + $0x20] sm:$0xff] %v281
                %v283 = vld [vmem:[%s271 + $0x48] sm:$0xff]
                %284 = vst [vmem:[%s272 + $0x28] sm:$0xff] %v283
                %v285 = vld [vmem:[%s271 + $0x60] sm:$0xff]
                %286 = vst [vmem:[%s272 + $0x30] sm:$0xff] %v285
                %v287 = vld [vmem:[%s271 + $0x68] sm:$0xff]
                %288 = vst [vmem:[%s272 + $0x38] sm:$0xff] %v287
              $region45: #{graphsage_forward.3} parent=39 // loop_footer
                %s270 = sadd.s32 1, %s266
              $region46: #{graphsage_forward.3} parent=39 // loop_footer_branch
                %265 = sbr.rel target = $region42
              $region47: #{graphsage_forward.3} parent=39 // loop_exit
                _
            $region40: #{graphsage_forward.3} parent=35 // pred_fallthru
              _
            // Predicated region
            $region48: #{graphsage_forward.3} parent=35 // pred_check
              _
            $region49: #{graphsage_forward.3} parent=35 // pred_check_branch
              %290 = sbr.rel target = $region51
            $region50: #{graphsage_forward.3} parent=35 // pred_region
              _
            $region51: #{graphsage_forward.3} parent=35 // pred_fallthru
              _
          $region36: #{graphsage_forward.3} parent=31 // pred_fallthru
            _
          %291 = vnop
        $region32: #{graphsage_forward.3} parent=27 // pred_fallthru
          _
        // Predicated region
        $region52: #{graphsage_forward.3} parent=27 // pred_check
          %p292 = pneg %p73
        $region53: #{graphsage_forward.3} parent=27 // pred_check_branch
          %294 = sbr.rel (%p292) target = $region55
        $region54: #{graphsage_forward.3} parent=27 // pred_region
          %s295 = smul.u32 32, %s21
          %p296 = scmp.lt.s32.totalorder %s295, 63
          %s297 = scalar_select %p296, %s295, 63
          %s298 = smul.addr %s297, 4
          %s299 = scalar_lea.vmem %s1, %s298
          %s300 = smul.u32 32, %s21
        $region55: #{graphsage_forward.3} parent=27 // pred_fallthru
          _
        // Predicated region
        $region56: #{graphsage_forward.3} parent=27 // pred_check
          %p301 = pneg %p99
        $region57: #{graphsage_forward.3} parent=27 // pred_check_branch
          %303 = sbr.rel (%p301) target = $region59
        $region58: #{graphsage_forward.3} parent=27 // pred_region
          %s304 = smul.u32 16, %s20
          %p305 = scmp.lt.s32.totalorder %s304, 63
          %s306 = scalar_select %p305, %s304, 63
          %s307 = smul.addr %s306, 4
          %s308 = scalar_lea.vmem %s2, %s307
          %s309 = smul.u32 16, %s20
        $region59: #{graphsage_forward.3} parent=27 // pred_fallthru
          _
        // Predicated region
        $region60: #{graphsage_forward.3} parent=27 // pred_check
          %p310 = pneg %p125
        $region61: #{graphsage_forward.3} parent=27 // pred_check_branch
          %312 = sbr.rel (%p310) target = $region63
        $region62: #{graphsage_forward.3} parent=27 // pred_region
          %s313 = smul.u32 16, %s20
          %p314 = scmp.lt.s32.totalorder %s313, 63
          %s315 = scalar_select %p314, %s313, 63
          %s316 = smul.addr %s315, 8
          %s317 = scalar_lea.vmem %s3, %s316
          %s318 = smul.u32 16, %s20
        $region63: #{graphsage_forward.3} parent=27 // pred_fallthru
          _
      $region28: #{graphsage_forward.3} parent=5 // pred_fallthru
        _
      %p319 = scmp.le.s32.totalorder 1, %s13
      %p320 = scmp.lt.s32.totalorder %s13, 9
      %p321 = pnand %p319, %p320
      %p322 = pneg %p321
      // Predicated region
      $region64: #{graphsage_forward.3} parent=5 // pred_check
        _
      $region65: #{graphsage_forward.3} parent=5 // pred_check_branch
        %324 = sbr.rel (%p321) target = $region67
      $region66: #{graphsage_forward.3} parent=5 // pred_region
        %s325 = ssub.s32 %s13, 1
        %s326 = sand.u32 %s40, 1
        %s327 = sand.u32 %s40, 1
        %s328 = smul.addr %s327, 64
        %s329 = scalar_lea.vmem [#allocation4], %s328
        // Predicated region
        $region68: #{graphsage_forward.3} parent=66 // pred_check
          %p330 = pneg %p53
        $region69: #{graphsage_forward.3} parent=66 // pred_check_branch
          %332 = sbr.rel (%p330) target = $region71
        $region70: #{graphsage_forward.3} parent=66 // pred_region
          _
        $region71: #{graphsage_forward.3} parent=66 // pred_fallthru
          _
        %s333 = sand.u32 %s40, 1
        %s334 = sand.u32 %s40, 1
        %s335 = smul.addr %s334, 64
        %s336 = scalar_lea.vmem [#allocation4], %s335
        %p337 = pneg %p53
        %p338 = pneg %p50
        %s339 = smul.u32 32, %s23
        %p340 = scmp.lt.s32.totalorder %s339, 63
        %s341 = scalar_select %p340, %s339, 63
        %s342 = smul.addr %s341, 4
        %s343 = scalar_lea.vmem %s1, %s342
        %p344 = pneg %p79
        %p345 = pneg %p76
        %s346 = smul.u32 16, %s22
        %p347 = scmp.lt.s32.totalorder %s346, 63
        %s348 = scalar_select %p347, %s346, 63
        %s349 = smul.addr %s348, 4
        %s350 = scalar_lea.vmem %s2, %s349
        %p351 = pneg %p105
        %p352 = pneg %p102
        %s353 = smul.u32 16, %s22
        %p354 = scmp.lt.s32.totalorder %s353, 63
        %s355 = scalar_select %p354, %s353, 63
        %s356 = smul.addr %s355, 8
        %s357 = scalar_lea.vmem %s3, %s356
        %p358 = pneg %p131
        %p359 = pneg %p128
        %p360 = pneg %p152
        %p361 = pneg %p149
        %p362 = pneg %p173
        %p363 = pneg %p170
        %p364 = pneg %p194
        %p365 = pneg %p191
        %p366 = pneg %p220
        %p367 = pneg %p217
        %s368 = smul.u32 16, %s22
        %p369 = scmp.lt.s32.totalorder %s368, 63
        %s370 = scalar_select %p369, %s368, 63
        %s371 = smul.addr %s370, 8
        %s372 = scalar_lea.vmem %s7, %s371
        %s373 = smul.u32 4, %s22
        %s374 = smul.u32 2, %s23
        %s375 = smul.u32 32, %s23
        %p376 = scmp.lt.s32.totalorder %s375, 63
        %s377 = scalar_select %p376, %s375, 63
        %s378 = smul.addr %s377, 4
        %s379 = scalar_lea.vmem %s1, %s378
        %s380 = smul.u32 32, %s23
        %s381 = smul.u32 16, %s22
        %p382 = scmp.lt.s32.totalorder %s381, 63
        %s383 = scalar_select %p382, %s381, 63
        %s384 = smul.addr %s383, 4
        %s385 = scalar_lea.vmem %s2, %s384
        %s386 = smul.u32 16, %s22
        %s387 = smul.u32 16, %s22
        %p388 = scmp.lt.s32.totalorder %s387, 63
        %s389 = scalar_select %p388, %s387, 63
        %s390 = smul.addr %s389, 8
        %s391 = scalar_lea.vmem %s3, %s390
        %s392 = smul.u32 16, %s22
        %s393 = smul.u32 16, %s22
        %p394 = scmp.lt.s32.totalorder %s393, 63
        %s395 = scalar_select %p394, %s393, 63
        %s396 = smul.addr %s395, 8
        %s397 = scalar_lea.vmem %s7, %s396
        %s398 = smul.u32 16, %s22
        %v400 = vld [vmem:[%s329] sm:$0xff]
        %v401 = vld [vmem:[%s329 + $0x8] sm:$0xff]
        %v402 = vld [vmem:[%s329 + $0x10] sm:$0xff]
        %v403 = vld [vmem:[%s329 + $0x18] sm:$0xff]
        %v404 = vld [vmem:[%s329 + $0x20] sm:$0xff]
        %v405 = vld [vmem:[%s329 + $0x28] sm:$0xff]
        %v406 = vld [vmem:[%s329 + $0x30] sm:$0xff]
        %v407 = vld [vmem:[%s329 + $0x38] sm:$0xff]
        %v408 = vunpack.c.l.s8.bf16 %v400
        %v409 = vunpack.c.l.s8.bf16 %v401
        %v410 = vunpack.c.h.s8.bf16 %v400
        %v411 = vunpack.c.h.s8.bf16 %v401
        %v412 = vunpack.c.l.s8.bf16 %v402
        %v413 = vunpack.c.l.s8.bf16 %v403
        %v414 = vunpack.c.h.s8.bf16 %v402
        %v415 = vunpack.c.h.s8.bf16 %v403
        %v416 = vunpack.c.l.s8.bf16 %v404
        %v417 = vunpack.c.l.s8.bf16 %v405
        %v418 = vunpack.c.h.s8.bf16 %v404
        %v419 = vunpack.c.h.s8.bf16 %v405
        %v420 = vunpack.c.l.s8.bf16 %v406
        %v421 = vunpack.c.l.s8.bf16 %v407
        %v422 = vunpack.c.h.s8.bf16 %v406
        %v423 = vunpack.c.h.s8.bf16 %v407
        %v424 = vld [vmem:[%s379] sm:$0xf]
        %v425 = vld [vmem:[%s379 + $0x4] sm:$0xf]
        %v426 = vld [vmem:[%s379 + $0x8] sm:$0xf]
        %v427 = vld [vmem:[%s379 + $0xc] sm:$0xf]
        %v428 = vld [vmem:[%s379 + $0x10] sm:$0xf]
        %v429 = vld [vmem:[%s379 + $0x14] sm:$0xf]
        %v430 = vld [vmem:[%s379 + $0x18] sm:$0xf]
        %v431 = vld [vmem:[%s379 + $0x1c] sm:$0xf]
        %v432 = vld [vmem:[%s379 + $0x20] sm:$0xf]
        %v433 = vld [vmem:[%s379 + $0x24] sm:$0xf]
        %v434 = vld [vmem:[%s379 + $0x28] sm:$0xf]
        %v435 = vld [vmem:[%s379 + $0x2c] sm:$0xf]
        %v436 = vld [vmem:[%s379 + $0x30] sm:$0xf]
        %v437 = vld [vmem:[%s379 + $0x34] sm:$0xf]
        %v438 = vld [vmem:[%s379 + $0x38] sm:$0xf]
        %v439 = vld [vmem:[%s379 + $0x3c] sm:$0xf]
        %v440 = vld [vmem:[%s379 + $0x40] sm:$0xf]
        %v441 = vld [vmem:[%s379 + $0x44] sm:$0xf]
        %v442 = vld [vmem:[%s379 + $0x48] sm:$0xf]
        %v443 = vld [vmem:[%s379 + $0x4c] sm:$0xf]
        %v444 = vld [vmem:[%s379 + $0x50] sm:$0xf]
        %v445 = vld [vmem:[%s379 + $0x54] sm:$0xf]
        %v446 = vld [vmem:[%s379 + $0x58] sm:$0xf]
        %v447 = vld [vmem:[%s379 + $0x5c] sm:$0xf]
        %v448 = vld [vmem:[%s379 + $0x60] sm:$0xf]
        %v449 = vld [vmem:[%s379 + $0x64] sm:$0xf]
        %v450 = vld [vmem:[%s379 + $0x68] sm:$0xf]
        %v451 = vld [vmem:[%s379 + $0x6c] sm:$0xf]
        %v452 = vld [vmem:[%s379 + $0x70] sm:$0xf]
        %v453 = vld [vmem:[%s379 + $0x74] sm:$0xf]
        %v454 = vld [vmem:[%s379 + $0x78] sm:$0xf]
        %v455 = vld [vmem:[%s379 + $0x7c] sm:$0xf]
        %v488 = vunpack.c.l.b16 %v424
        %v489 = vunpack.c.l.b16 %v425
        %v490 = vunpack.c.l.b16 %v426
        %v491 = vunpack.c.l.b16 %v427
        %v492 = vunpack.c.l.b16 %v428
        %v493 = vunpack.c.l.b16 %v429
        %v494 = vunpack.c.l.b16 %v430
        %v495 = vunpack.c.l.b16 %v431
        %v496 = vunpack.c.l.b16 %v432
        %v497 = vunpack.c.l.b16 %v433
        %v498 = vunpack.c.l.b16 %v434
        %v499 = vunpack.c.l.b16 %v435
        %v500 = vunpack.c.l.b16 %v436
        %v501 = vunpack.c.l.b16 %v437
        %v502 = vunpack.c.l.b16 %v438
        %v503 = vunpack.c.l.b16 %v439
        %v504 = vunpack.c.l.b16 %v440
        %v505 = vunpack.c.l.b16 %v441
        %v506 = vunpack.c.l.b16 %v442
        %v507 = vunpack.c.l.b16 %v443
        %v508 = vunpack.c.l.b16 %v444
        %v509 = vunpack.c.l.b16 %v445
        %v510 = vunpack.c.l.b16 %v446
        %v511 = vunpack.c.l.b16 %v447
        %v512 = vunpack.c.l.b16 %v448
        %v513 = vunpack.c.l.b16 %v449
        %v514 = vunpack.c.l.b16 %v450
        %v515 = vunpack.c.l.b16 %v451
        %v516 = vunpack.c.l.b16 %v452
        %v517 = vunpack.c.l.b16 %v453
        %v518 = vunpack.c.l.b16 %v454
        %v519 = vunpack.c.l.b16 %v455
        %v520 = vpack.c.b16 %v489, %v488
        %v521 = vpack.c.b16 %v491, %v490
        %v522 = vpack.c.b16 %v493, %v492
        %v523 = vpack.c.b16 %v495, %v494
        %v524 = vpack.c.b16 %v497, %v496
        %v525 = vpack.c.b16 %v499, %v498
        %v526 = vpack.c.b16 %v501, %v500
        %v527 = vpack.c.b16 %v503, %v502
        %v528 = vpack.c.b16 %v505, %v504
        %v529 = vpack.c.b16 %v507, %v506
        %v530 = vpack.c.b16 %v509, %v508
        %v531 = vpack.c.b16 %v511, %v510
        %v532 = vpack.c.b16 %v513, %v512
        %v533 = vpack.c.b16 %v515, %v514
        %v534 = vpack.c.b16 %v517, %v516
        %v535 = vpack.c.b16 %v519, %v518
        %552 = vmatprep.subr.bf16.mxu0 0
        %553 = vmatpush1.bf16.msra.mxu0 %v520
        %554 = vmatprep.subr.bf16.mxu0 0
        %555 = vmatpush1.bf16.msra.mxu0 %v521
        %556 = vmatprep.subr.bf16.mxu0 0
        %557 = vmatpush1.bf16.msra.mxu0 %v522
        %558 = vmatprep.subr.bf16.mxu0 0
        %559 = vmatpush1.bf16.msra.mxu0 %v523
        %560 = vmatprep.subr.bf16.mxu0 0
        %561 = vmatpush1.bf16.msra.mxu0 %v524
        %562 = vmatprep.subr.bf16.mxu0 0
        %563 = vmatpush1.bf16.msra.mxu0 %v525
        %564 = vmatprep.subr.bf16.mxu0 0
        %565 = vmatpush1.bf16.msra.mxu0 %v526
        %566 = vmatprep.subr.bf16.mxu0 0
        %567 = vmatpush1.bf16.msra.mxu0 %v527
        %568 = vmatprep.subr.bf16.mxu0 0
        %569 = vmatpush1.bf16.msra.mxu0 %v528
        %570 = vmatprep.subr.bf16.mxu0 0
        %571 = vmatpush1.bf16.msra.mxu0 %v529
        %572 = vmatprep.subr.bf16.mxu0 0
        %573 = vmatpush1.bf16.msra.mxu0 %v530
        %574 = vmatprep.subr.bf16.mxu0 0
        %575 = vmatpush1.bf16.msra.mxu0 %v531
        %576 = vmatprep.subr.bf16.mxu0 0
        %577 = vmatpush1.bf16.msra.mxu0 %v532
        %578 = vmatprep.subr.bf16.mxu0 0
        %579 = vmatpush1.bf16.msra.mxu0 %v533
        %580 = vmatprep.subr.bf16.mxu0 0
        %581 = vmatpush1.bf16.msra.mxu0 %v534
        %582 = vmatprep.subr.bf16.mxu0 0
        %583 = vmatpush1.bf16.msra.mxu0 %v535
        %584 = vmatprep.mubr.bf16.mxu0 %v409
        %585 = vmatmul.mubr.bf16.gmra.mrb[0].mxu0 %v408
        %v586 = vpop.f32.mrb[0].mxu0
        %v587 = vadd.f32 0.0, %v586
        %v588 = vpop.f32.mrb[0].mxu0
        %v589 = vpop.f32.mrb[0].mxu0
        %v590 = vadd.f32 0.0, %v589
        %v591 = vpop.f32.mrb[0].mxu0
        %592 = vmatprep.mubr.bf16.mxu0 %v411
        %593 = vmatmul.mubr.bf16.gmra.mrb[0].mxu0 %v410
        %v594 = vpop.f32.mrb[0].mxu0
        %v595 = vadd.f32 0.0, %v594
        %v596 = vpop.f32.mrb[0].mxu0
        %v597 = vpop.f32.mrb[0].mxu0
        %v598 = vadd.f32 0.0, %v597
        %v599 = vpop.f32.mrb[0].mxu0
        %600 = vmatprep.mubr.bf16.mxu0 %v413
        %601 = vmatmul.mubr.bf16.gmra.mrb[0].mxu0 %v412
        %v602 = vpop.f32.mrb[0].mxu0
        %v603 = vadd.f32 0.0, %v602
        %v604 = vpop.f32.mrb[0].mxu0
        %v605 = vpop.f32.mrb[0].mxu0
        %v606 = vadd.f32 0.0, %v605
        %v607 = vpop.f32.mrb[0].mxu0
        %608 = vmatprep.mubr.bf16.mxu0 %v415
        %609 = vmatmul.mubr.bf16.gmra.mrb[0].mxu0 %v414
        %v610 = vpop.f32.mrb[0].mxu0
        %v611 = vadd.f32 0.0, %v610
        %v612 = vpop.f32.mrb[0].mxu0
        %v613 = vpop.f32.mrb[0].mxu0
        %v614 = vadd.f32 0.0, %v613
        %v615 = vpop.f32.mrb[0].mxu0
        %616 = vmatprep.mubr.bf16.mxu0 %v417
        %617 = vmatmul.mubr.bf16.gmra.mrb[0].mxu0 %v416
        %v618 = vpop.f32.mrb[0].mxu0
        %v619 = vadd.f32 0.0, %v618
        %v620 = vpop.f32.mrb[0].mxu0
        %v621 = vpop.f32.mrb[0].mxu0
        %v622 = vadd.f32 0.0, %v621
        %v623 = vpop.f32.mrb[0].mxu0
        %624 = vmatprep.mubr.bf16.mxu0 %v419
        %625 = vmatmul.mubr.bf16.gmra.mrb[0].mxu0 %v418
        %v626 = vpop.f32.mrb[0].mxu0
        %v627 = vadd.f32 0.0, %v626
        %v628 = vpop.f32.mrb[0].mxu0
        %v629 = vpop.f32.mrb[0].mxu0
        %v630 = vadd.f32 0.0, %v629
        %v631 = vpop.f32.mrb[0].mxu0
        %632 = vmatprep.mubr.bf16.mxu0 %v421
        %633 = vmatmul.mubr.bf16.gmra.mrb[0].mxu0 %v420
        %v634 = vpop.f32.mrb[0].mxu0
        %v635 = vadd.f32 0.0, %v634
        %v636 = vpop.f32.mrb[0].mxu0
        %v637 = vpop.f32.mrb[0].mxu0
        %v638 = vadd.f32 0.0, %v637
        %v639 = vpop.f32.mrb[0].mxu0
        %640 = vmatprep.mubr.bf16.mxu0 %v423
        %641 = vmatmul.mubr.bf16.gmra.mrb[0].mxu0 %v422
        %v642 = vpop.f32.mrb[0].mxu0
        %v643 = vadd.f32 0.0, %v642
        %v644 = vpop.f32.mrb[0].mxu0
        %v645 = vpop.f32.mrb[0].mxu0
        %v646 = vadd.f32 0.0, %v645
        %v647 = vpop.f32.mrb[0].mxu0
        %648 = vdwg.mxu0
        %p649 = scmp.eq.s32.totalorder %s23, 0
        // Predicated region
        $region72: #{graphsage_forward.3} parent=66 // pred_check
          %p650 = pneg %p649
        $region73: #{graphsage_forward.3} parent=66 // pred_check_branch
          %652 = sbr.rel (%p650) target = $region75
        $region74: #{graphsage_forward.3} parent=66 // pred_region
          %653 = vst [vmem:[#allocation2] sm:$0xff] %v587
          %654 = vst [vmem:[#allocation2 + $0x8] sm:$0xff] %v590
          %655 = vst [vmem:[#allocation2 + $0x10] sm:$0xff] %v595
          %656 = vst [vmem:[#allocation2 + $0x18] sm:$0xff] %v598
          %657 = vst [vmem:[#allocation2 + $0x20] sm:$0xff] %v603
          %658 = vst [vmem:[#allocation2 + $0x28] sm:$0xff] %v606
          %659 = vst [vmem:[#allocation2 + $0x30] sm:$0xff] %v611
          %660 = vst [vmem:[#allocation2 + $0x38] sm:$0xff] %v614
          %661 = vst [vmem:[#allocation2 + $0x40] sm:$0xff] %v619
          %662 = vst [vmem:[#allocation2 + $0x48] sm:$0xff] %v622
          %663 = vst [vmem:[#allocation2 + $0x50] sm:$0xff] %v627
          %664 = vst [vmem:[#allocation2 + $0x58] sm:$0xff] %v630
          %665 = vst [vmem:[#allocation2 + $0x60] sm:$0xff] %v635
          %666 = vst [vmem:[#allocation2 + $0x68] sm:$0xff] %v638
          %667 = vst [vmem:[#allocation2 + $0x70] sm:$0xff] %v643
          %668 = vst [vmem:[#allocation2 + $0x78] sm:$0xff] %v646
          %v669 = vld [vmem:[%s385] sm:$0xf]
          %v670 = vld [vmem:[%s385 + $0x4] sm:$0xf]
          %v671 = vld [vmem:[%s385 + $0x8] sm:$0xf]
          %v672 = vld [vmem:[%s385 + $0xc] sm:$0xf]
          %v673 = vld [vmem:[%s385 + $0x10] sm:$0xf]
          %v674 = vld [vmem:[%s385 + $0x14] sm:$0xf]
          %v675 = vld [vmem:[%s385 + $0x18] sm:$0xf]
          %v676 = vld [vmem:[%s385 + $0x1c] sm:$0xf]
          %v677 = vld [vmem:[%s385 + $0x20] sm:$0xf]
          %v678 = vld [vmem:[%s385 + $0x24] sm:$0xf]
          %v679 = vld [vmem:[%s385 + $0x28] sm:$0xf]
          %v680 = vld [vmem:[%s385 + $0x2c] sm:$0xf]
          %v681 = vld [vmem:[%s385 + $0x30] sm:$0xf]
          %v682 = vld [vmem:[%s385 + $0x34] sm:$0xf]
          %v683 = vld [vmem:[%s385 + $0x38] sm:$0xf]
          %v684 = vld [vmem:[%s385 + $0x3c] sm:$0xf]
          %v685 = vld [vmem:[%s4] sm:$0xf]
          %v686 = vld [vmem:[%s4 + $0x4] sm:$0xf]
          %v687 = vld [vmem:[%s4 + $0x8] sm:$0xf]
          %v688 = vld [vmem:[%s4 + $0xc] sm:$0xf]
          %v689 = vld [vmem:[%s4 + $0x10] sm:$0xf]
          %v690 = vld [vmem:[%s4 + $0x14] sm:$0xf]
          %v691 = vld [vmem:[%s4 + $0x18] sm:$0xf]
          %v692 = vld [vmem:[%s4 + $0x1c] sm:$0xf]
          %v693 = vld [vmem:[%s4 + $0x20] sm:$0xf]
          %v694 = vld [vmem:[%s4 + $0x24] sm:$0xf]
          %v695 = vld [vmem:[%s4 + $0x28] sm:$0xf]
          %v696 = vld [vmem:[%s4 + $0x2c] sm:$0xf]
          %v697 = vld [vmem:[%s4 + $0x30] sm:$0xf]
          %v698 = vld [vmem:[%s4 + $0x34] sm:$0xf]
          %v699 = vld [vmem:[%s4 + $0x38] sm:$0xf]
          %v700 = vld [vmem:[%s4 + $0x3c] sm:$0xf]
          %v701 = vld [vmem:[%s6] sm:$0x1]
          %v703 = vlaneseq
          %v704 = vshrl.u32 %v703, 7
          %v705 = vsub.s32 0, %v704
          %v706 = vrot.slane %v701, %v705
          %v724 = vunpack.c.l.b16 %v669
          %v725 = vunpack.c.l.b16 %v670
          %v726 = vunpack.c.l.b16 %v671
          %v727 = vunpack.c.l.b16 %v672
          %v728 = vunpack.c.l.b16 %v673
          %v729 = vunpack.c.l.b16 %v674
          %v730 = vunpack.c.l.b16 %v675
          %v731 = vunpack.c.l.b16 %v676
          %v732 = vunpack.c.l.b16 %v677
          %v733 = vunpack.c.l.b16 %v678
          %v734 = vunpack.c.l.b16 %v679
          %v735 = vunpack.c.l.b16 %v680
          %v736 = vunpack.c.l.b16 %v681
          %v737 = vunpack.c.l.b16 %v682
          %v738 = vunpack.c.l.b16 %v683
          %v739 = vunpack.c.l.b16 %v684
          %v740 = vpack.c.b16 %v725, %v724
          %v741 = vpack.c.b16 %v727, %v726
          %v742 = vpack.c.b16 %v729, %v728
          %v743 = vpack.c.b16 %v731, %v730
          %v744 = vpack.c.b16 %v733, %v732
          %v745 = vpack.c.b16 %v735, %v734
          %v746 = vpack.c.b16 %v737, %v736
          %v747 = vpack.c.b16 %v739, %v738
          %v772 = vunpack.c.l.b16 %v685
          %v773 = vunpack.c.l.b16 %v686
          %v774 = vunpack.c.l.b16 %v687
          %v775 = vunpack.c.l.b16 %v688
          %v776 = vunpack.c.l.b16 %v689
          %v777 = vunpack.c.l.b16 %v690
          %v778 = vunpack.c.l.b16 %v691
          %v779 = vunpack.c.l.b16 %v692
          %v780 = vunpack.c.l.b16 %v693
          %v781 = vunpack.c.l.b16 %v694
          %v782 = vunpack.c.l.b16 %v695
          %v783 = vunpack.c.l.b16 %v696
          %v784 = vunpack.c.l.b16 %v697
          %v785 = vunpack.c.l.b16 %v698
          %v786 = vunpack.c.l.b16 %v699
          %v787 = vunpack.c.l.b16 %v700
          %v788 = vpack.c.b16 %v773, %v772
          %v789 = vpack.c.b16 %v775, %v774
          %v790 = vpack.c.b16 %v777, %v776
          %v791 = vpack.c.b16 %v779, %v778
          %v792 = vpack.c.b16 %v781, %v780
          %v793 = vpack.c.b16 %v783, %v782
          %v794 = vpack.c.b16 %v785, %v784
          %v795 = vpack.c.b16 %v787, %v786
          %804 = vmatprep.subr.bf16.mxu0 0
          %805 = vmatpush1.bf16.msra.mxu0 %v788
          %806 = vmatprep.subr.bf16.mxu0 0
          %807 = vmatpush1.bf16.msra.mxu0 %v789
          %808 = vmatprep.subr.bf16.mxu0 0
          %809 = vmatpush1.bf16.msra.mxu0 %v790
          %810 = vmatprep.subr.bf16.mxu0 0
          %811 = vmatpush1.bf16.msra.mxu0 %v791
          %812 = vmatprep.subr.bf16.mxu0 0
          %813 = vmatpush1.bf16.msra.mxu0 %v792
          %814 = vmatprep.subr.bf16.mxu0 0
          %815 = vmatpush1.bf16.msra.mxu0 %v793
          %816 = vmatprep.subr.bf16.mxu0 0
          %817 = vmatpush1.bf16.msra.mxu0 %v794
          %818 = vmatprep.subr.bf16.mxu0 0
          %819 = vmatpush1.bf16.msra.mxu0 %v795
          %820 = vmatprep.subr.bf16.mxu0 0
          %821 = vmatpush1.bf16.msra.mxu0 0
          %822 = vmatprep.subr.bf16.mxu0 0
          %823 = vmatpush1.bf16.msra.mxu0 0
          %824 = vmatprep.subr.bf16.mxu0 0
          %825 = vmatpush1.bf16.msra.mxu0 0
          %826 = vmatprep.subr.bf16.mxu0 0
          %827 = vmatpush1.bf16.msra.mxu0 0
          %828 = vmatprep.subr.bf16.mxu0 0
          %829 = vmatpush1.bf16.msra.mxu0 0
          %830 = vmatprep.subr.bf16.mxu0 0
          %831 = vmatpush1.bf16.msra.mxu0 0
          %832 = vmatprep.subr.bf16.mxu0 0
          %833 = vmatpush1.bf16.msra.mxu0 0
          %834 = vmatprep.subr.bf16.mxu0 0
          %835 = vmatpush1.bf16.msra.mxu0 0
          %836 = vmatprep.mubr.bf16.mxu0 0
          %837 = vmatmul.mubr.bf16.gmra.mrb[0].mxu0 %v740
          %v838 = vpop.f32.mrb[0].mxu0
          %v839 = vadd.f32 %v706, %v838
          %v840 = vpop.f32.mrb[0].mxu0
          %v841 = vpop.f32.mrb[0].mxu0
          %v842 = vadd.f32 %v706, %v841
          %v843 = vpop.f32.mrb[0].mxu0
          %844 = vmatprep.mubr.bf16.mxu0 0
          %845 = vmatmul.mubr.bf16.gmra.mrb[0].mxu0 %v741
          %v846 = vpop.f32.mrb[0].mxu0
          %v847 = vadd.f32 %v706, %v846
          %v848 = vpop.f32.mrb[0].mxu0
          %v849 = vpop.f32.mrb[0].mxu0
          %v850 = vadd.f32 %v706, %v849
          %v851 = vpop.f32.mrb[0].mxu0
          %852 = vmatprep.mubr.bf16.mxu0 0
          %853 = vmatmul.mubr.bf16.gmra.mrb[0].mxu0 %v742
          %v854 = vpop.f32.mrb[0].mxu0
          %v855 = vadd.f32 %v706, %v854
          %v856 = vpop.f32.mrb[0].mxu0
          %v857 = vpop.f32.mrb[0].mxu0
          %v858 = vadd.f32 %v706, %v857
          %v859 = vpop.f32.mrb[0].mxu0
          %860 = vmatprep.mubr.bf16.mxu0 0
          %861 = vmatmul.mubr.bf16.gmra.mrb[0].mxu0 %v743
          %v862 = vpop.f32.mrb[0].mxu0
          %v863 = vadd.f32 %v706, %v862
          %v864 = vpop.f32.mrb[0].mxu0
          %v865 = vpop.f32.mrb[0].mxu0
          %v866 = vadd.f32 %v706, %v865
          %v867 = vpop.f32.mrb[0].mxu0
          %868 = vmatprep.mubr.bf16.mxu0 0
          %869 = vmatmul.mubr.bf16.gmra.mrb[0].mxu0 %v744
          %v870 = vpop.f32.mrb[0].mxu0
          %v871 = vadd.f32 %v706, %v870
          %v872 = vpop.f32.mrb[0].mxu0
          %v873 = vpop.f32.mrb[0].mxu0
          %v874 = vadd.f32 %v706, %v873
          %v875 = vpop.f32.mrb[0].mxu0
          %876 = vmatprep.mubr.bf16.mxu0 0
          %877 = vmatmul.mubr.bf16.gmra.mrb[0].mxu0 %v745
          %v878 = vpop.f32.mrb[0].mxu0
          %v879 = vadd.f32 %v706, %v878
          %v880 = vpop.f32.mrb[0].mxu0
          %v881 = vpop.f32.mrb[0].mxu0
          %v882 = vadd.f32 %v706, %v881
          %v883 = vpop.f32.mrb[0].mxu0
          %884 = vmatprep.mubr.bf16.mxu0 0
          %885 = vmatmul.mubr.bf16.gmra.mrb[0].mxu0 %v746
          %v886 = vpop.f32.mrb[0].mxu0
          %v887 = vadd.f32 %v706, %v886
          %v888 = vpop.f32.mrb[0].mxu0
          %v889 = vpop.f32.mrb[0].mxu0
          %v890 = vadd.f32 %v706, %v889
          %v891 = vpop.f32.mrb[0].mxu0
          %892 = vmatprep.mubr.bf16.mxu0 0
          %893 = vmatmul.mubr.bf16.gmra.mrb[0].mxu0 %v747
          %v894 = vpop.f32.mrb[0].mxu0
          %v895 = vadd.f32 %v706, %v894
          %v896 = vpop.f32.mrb[0].mxu0
          %v897 = vpop.f32.mrb[0].mxu0
          %v898 = vadd.f32 %v706, %v897
          %v899 = vpop.f32.mrb[0].mxu0
          %900 = vdwg.mxu0
          %901 = vst [vmem:[#allocation3] sm:$0xff] %v839
          %902 = vst [vmem:[#allocation3 + $0x8] sm:$0xff] %v842
          %903 = vst [vmem:[#allocation3 + $0x10] sm:$0xff] %v847
          %904 = vst [vmem:[#allocation3 + $0x18] sm:$0xff] %v850
          %905 = vst [vmem:[#allocation3 + $0x20] sm:$0xff] %v855
          %906 = vst [vmem:[#allocation3 + $0x28] sm:$0xff] %v858
          %907 = vst [vmem:[#allocation3 + $0x30] sm:$0xff] %v863
          %908 = vst [vmem:[#allocation3 + $0x38] sm:$0xff] %v866
          %909 = vst [vmem:[#allocation3 + $0x40] sm:$0xff] %v871
          %910 = vst [vmem:[#allocation3 + $0x48] sm:$0xff] %v874
          %911 = vst [vmem:[#allocation3 + $0x50] sm:$0xff] %v879
          %912 = vst [vmem:[#allocation3 + $0x58] sm:$0xff] %v882
          %913 = vst [vmem:[#allocation3 + $0x60] sm:$0xff] %v887
          %914 = vst [vmem:[#allocation3 + $0x68] sm:$0xff] %v890
          %915 = vst [vmem:[#allocation3 + $0x70] sm:$0xff] %v895
          %916 = vst [vmem:[#allocation3 + $0x78] sm:$0xff] %v898
        $region75: #{graphsage_forward.3} parent=66 // pred_fallthru
          _
        %p917 = scmp.gt.s32.totalorder %s23, 0
        // Predicated region
        $region76: #{graphsage_forward.3} parent=66 // pred_check
          %p918 = pneg %p917
        $region77: #{graphsage_forward.3} parent=66 // pred_check_branch
          %920 = sbr.rel (%p918) target = $region79
        $region78: #{graphsage_forward.3} parent=66 // pred_region
          %v921 = vld [vmem:[#allocation2] sm:$0xff]
          %v922 = vld [vmem:[#allocation2 + $0x8] sm:$0xff]
          %v923 = vld [vmem:[#allocation2 + $0x10] sm:$0xff]
          %v924 = vld [vmem:[#allocation2 + $0x18] sm:$0xff]
          %v925 = vld [vmem:[#allocation2 + $0x20] sm:$0xff]
          %v926 = vld [vmem:[#allocation2 + $0x28] sm:$0xff]
          %v927 = vld [vmem:[#allocation2 + $0x30] sm:$0xff]
          %v928 = vld [vmem:[#allocation2 + $0x38] sm:$0xff]
          %v929 = vld [vmem:[#allocation2 + $0x40] sm:$0xff]
          %v930 = vld [vmem:[#allocation2 + $0x48] sm:$0xff]
          %v931 = vld [vmem:[#allocation2 + $0x50] sm:$0xff]
          %v932 = vld [vmem:[#allocation2 + $0x58] sm:$0xff]
          %v933 = vld [vmem:[#allocation2 + $0x60] sm:$0xff]
          %v934 = vld [vmem:[#allocation2 + $0x68] sm:$0xff]
          %v935 = vld [vmem:[#allocation2 + $0x70] sm:$0xff]
          %v936 = vld [vmem:[#allocation2 + $0x78] sm:$0xff]
          %v937 = vadd.f32 %v921, %v587
          %v938 = vadd.f32 %v922, %v590
          %v939 = vadd.f32 %v923, %v595
          %v940 = vadd.f32 %v924, %v598
          %v941 = vadd.f32 %v925, %v603
          %v942 = vadd.f32 %v926, %v606
          %v943 = vadd.f32 %v927, %v611
          %v944 = vadd.f32 %v928, %v614
          %v945 = vadd.f32 %v929, %v619
          %v946 = vadd.f32 %v930, %v622
          %v947 = vadd.f32 %v931, %v627
          %v948 = vadd.f32 %v932, %v630
          %v949 = vadd.f32 %v933, %v635
          %v950 = vadd.f32 %v934, %v638
          %v951 = vadd.f32 %v935, %v643
          %v952 = vadd.f32 %v936, %v646
          %953 = vst [vmem:[#allocation2] sm:$0xff] %v937
          %954 = vst [vmem:[#allocation2 + $0x8] sm:$0xff] %v938
          %955 = vst [vmem:[#allocation2 + $0x10] sm:$0xff] %v939
          %956 = vst [vmem:[#allocation2 + $0x18] sm:$0xff] %v940
          %957 = vst [vmem:[#allocation2 + $0x20] sm:$0xff] %v941
          %958 = vst [vmem:[#allocation2 + $0x28] sm:$0xff] %v942
          %959 = vst [vmem:[#allocation2 + $0x30] sm:$0xff] %v943
          %960 = vst [vmem:[#allocation2 + $0x38] sm:$0xff] %v944
          %961 = vst [vmem:[#allocation2 + $0x40] sm:$0xff] %v945
          %962 = vst [vmem:[#allocation2 + $0x48] sm:$0xff] %v946
          %963 = vst [vmem:[#allocation2 + $0x50] sm:$0xff] %v947
          %964 = vst [vmem:[#allocation2 + $0x58] sm:$0xff] %v948
          %965 = vst [vmem:[#allocation2 + $0x60] sm:$0xff] %v949
          %966 = vst [vmem:[#allocation2 + $0x68] sm:$0xff] %v950
          %967 = vst [vmem:[#allocation2 + $0x70] sm:$0xff] %v951
          %968 = vst [vmem:[#allocation2 + $0x78] sm:$0xff] %v952
        $region79: #{graphsage_forward.3} parent=66 // pred_fallthru
          _
        %p969 = scmp.eq.s32.totalorder %s23, 1
        // Predicated region
        $region80: #{graphsage_forward.3} parent=66 // pred_check
          %p970 = pneg %p969
        $region81: #{graphsage_forward.3} parent=66 // pred_check_branch
          %972 = sbr.rel (%p970) target = $region83
        $region82: #{graphsage_forward.3} parent=66 // pred_region
          %v973 = vld [vmem:[#allocation2] sm:$0xff]
          %v974 = vld [vmem:[#allocation2 + $0x8] sm:$0xff]
          %v975 = vld [vmem:[#allocation2 + $0x10] sm:$0xff]
          %v976 = vld [vmem:[#allocation2 + $0x18] sm:$0xff]
          %v977 = vld [vmem:[#allocation2 + $0x20] sm:$0xff]
          %v978 = vld [vmem:[#allocation2 + $0x28] sm:$0xff]
          %v979 = vld [vmem:[#allocation2 + $0x30] sm:$0xff]
          %v980 = vld [vmem:[#allocation2 + $0x38] sm:$0xff]
          %v981 = vld [vmem:[#allocation2 + $0x40] sm:$0xff]
          %v982 = vld [vmem:[#allocation2 + $0x48] sm:$0xff]
          %v983 = vld [vmem:[#allocation2 + $0x50] sm:$0xff]
          %v984 = vld [vmem:[#allocation2 + $0x58] sm:$0xff]
          %v985 = vld [vmem:[#allocation2 + $0x60] sm:$0xff]
          %v986 = vld [vmem:[#allocation2 + $0x68] sm:$0xff]
          %v987 = vld [vmem:[#allocation2 + $0x70] sm:$0xff]
          %v988 = vld [vmem:[#allocation2 + $0x78] sm:$0xff]
          %v989 = vld [vmem:[%s391] sm:$0xff]
          %v990 = vld [vmem:[%s391 + $0x8] sm:$0xff]
          %v991 = vld [vmem:[%s391 + $0x10] sm:$0xff]
          %v992 = vld [vmem:[%s391 + $0x18] sm:$0xff]
          %v993 = vld [vmem:[%s391 + $0x20] sm:$0xff]
          %v994 = vld [vmem:[%s391 + $0x28] sm:$0xff]
          %v995 = vld [vmem:[%s391 + $0x30] sm:$0xff]
          %v996 = vld [vmem:[%s391 + $0x38] sm:$0xff]
          %v997 = vld [vmem:[%s391 + $0x40] sm:$0xff]
          %v998 = vld [vmem:[%s391 + $0x48] sm:$0xff]
          %v999 = vld [vmem:[%s391 + $0x50] sm:$0xff]
          %v1000 = vld [vmem:[%s391 + $0x58] sm:$0xff]
          %v1001 = vld [vmem:[%s391 + $0x60] sm:$0xff]
          %v1002 = vld [vmem:[%s391 + $0x68] sm:$0xff]
          %v1003 = vld [vmem:[%s391 + $0x70] sm:$0xff]
          %v1004 = vld [vmem:[%s391 + $0x78] sm:$0xff]
          %1006 = vset.pattern.permute.xlu0 0
          %1007 = vperm.xlu0 %1006, %v989
          %v1008 = vpop.permute.xlu0 %1007
          %1011 = vset.pattern.permute.xlu0 0
          %1012 = vperm.xlu0 %1011, %v990
          %v1013 = vpop.permute.xlu0 %1012
          %1016 = vset.pattern.permute.xlu0 0
          %1017 = vperm.xlu0 %1016, %v991
          %v1018 = vpop.permute.xlu0 %1017
          %1021 = vset.pattern.permute.xlu0 0
          %1022 = vperm.xlu0 %1021, %v992
          %v1023 = vpop.permute.xlu0 %1022
          %1026 = vset.pattern.permute.xlu0 0
          %1027 = vperm.xlu0 %1026, %v993
          %v1028 = vpop.permute.xlu0 %1027
          %1031 = vset.pattern.permute.xlu0 0
          %1032 = vperm.xlu0 %1031, %v994
          %v1033 = vpop.permute.xlu0 %1032
          %1036 = vset.pattern.permute.xlu0 0
          %1037 = vperm.xlu0 %1036, %v995
          %v1038 = vpop.permute.xlu0 %1037
          %1041 = vset.pattern.permute.xlu0 0
          %1042 = vperm.xlu0 %1041, %v996
          %v1043 = vpop.permute.xlu0 %1042
          %1046 = vset.pattern.permute.xlu0 0
          %1047 = vperm.xlu0 %1046, %v997
          %v1048 = vpop.permute.xlu0 %1047
          %1051 = vset.pattern.permute.xlu0 0
          %1052 = vperm.xlu0 %1051, %v998
          %v1053 = vpop.permute.xlu0 %1052
          %1056 = vset.pattern.permute.xlu0 0
          %1057 = vperm.xlu0 %1056, %v999
          %v1058 = vpop.permute.xlu0 %1057
          %1061 = vset.pattern.permute.xlu0 0
          %1062 = vperm.xlu0 %1061, %v1000
          %v1063 = vpop.permute.xlu0 %1062
          %1066 = vset.pattern.permute.xlu0 0
          %1067 = vperm.xlu0 %1066, %v1001
          %v1068 = vpop.permute.xlu0 %1067
          %1071 = vset.pattern.permute.xlu0 0
          %1072 = vperm.xlu0 %1071, %v1002
          %v1073 = vpop.permute.xlu0 %1072
          %1076 = vset.pattern.permute.xlu0 0
          %1077 = vperm.xlu0 %1076, %v1003
          %v1078 = vpop.permute.xlu0 %1077
          %1081 = vset.pattern.permute.xlu0 0
          %1082 = vperm.xlu0 %1081, %v1004
          %v1083 = vpop.permute.xlu0 %1082
          %v1085 = vmul.f32 %v973, %v1008
          %v1086 = vmul.f32 %v974, %v1013
          %v1087 = vmul.f32 %v975, %v1018
          %v1088 = vmul.f32 %v976, %v1023
          %v1089 = vmul.f32 %v977, %v1028
          %v1090 = vmul.f32 %v978, %v1033
          %v1091 = vmul.f32 %v979, %v1038
          %v1092 = vmul.f32 %v980, %v1043
          %v1093 = vmul.f32 %v981, %v1048
          %v1094 = vmul.f32 %v982, %v1053
          %v1095 = vmul.f32 %v983, %v1058
          %v1096 = vmul.f32 %v984, %v1063
          %v1097 = vmul.f32 %v985, %v1068
          %v1098 = vmul.f32 %v986, %v1073
          %v1099 = vmul.f32 %v987, %v1078
          %v1100 = vmul.f32 %v988, %v1083
          %v1101 = vpack.c.bf16 %v1086, %v1085
          %v1102 = vpack.c.bf16 %v1088, %v1087
          %v1103 = vpack.c.bf16 %v1090, %v1089
          %v1104 = vpack.c.bf16 %v1092, %v1091
          %v1105 = vpack.c.bf16 %v1094, %v1093
          %v1106 = vpack.c.bf16 %v1096, %v1095
          %v1107 = vpack.c.bf16 %v1098, %v1097
          %v1108 = vpack.c.bf16 %v1100, %v1099
          %v1109 = vld [vmem:[#allocation3] sm:$0xff]
          %v1110 = vld [vmem:[#allocation3 + $0x8] sm:$0xff]
          %v1111 = vld [vmem:[#allocation3 + $0x10] sm:$0xff]
          %v1112 = vld [vmem:[#allocation3 + $0x18] sm:$0xff]
          %v1113 = vld [vmem:[#allocation3 + $0x20] sm:$0xff]
          %v1114 = vld [vmem:[#allocation3 + $0x28] sm:$0xff]
          %v1115 = vld [vmem:[#allocation3 + $0x30] sm:$0xff]
          %v1116 = vld [vmem:[#allocation3 + $0x38] sm:$0xff]
          %v1117 = vld [vmem:[#allocation3 + $0x40] sm:$0xff]
          %v1118 = vld [vmem:[#allocation3 + $0x48] sm:$0xff]
          %v1119 = vld [vmem:[#allocation3 + $0x50] sm:$0xff]
          %v1120 = vld [vmem:[#allocation3 + $0x58] sm:$0xff]
          %v1121 = vld [vmem:[#allocation3 + $0x60] sm:$0xff]
          %v1122 = vld [vmem:[#allocation3 + $0x68] sm:$0xff]
          %v1123 = vld [vmem:[#allocation3 + $0x70] sm:$0xff]
          %v1124 = vld [vmem:[#allocation3 + $0x78] sm:$0xff]
          %v1125 = vld [vmem:[%s5] sm:$0xf]
          %v1126 = vld [vmem:[%s5 + $0x4] sm:$0xf]
          %v1127 = vld [vmem:[%s5 + $0x8] sm:$0xf]
          %v1128 = vld [vmem:[%s5 + $0xc] sm:$0xf]
          %v1129 = vld [vmem:[%s5 + $0x10] sm:$0xf]
          %v1130 = vld [vmem:[%s5 + $0x14] sm:$0xf]
          %v1131 = vld [vmem:[%s5 + $0x18] sm:$0xf]
          %v1132 = vld [vmem:[%s5 + $0x1c] sm:$0xf]
          %v1133 = vld [vmem:[%s5 + $0x20] sm:$0xf]
          %v1134 = vld [vmem:[%s5 + $0x24] sm:$0xf]
          %v1135 = vld [vmem:[%s5 + $0x28] sm:$0xf]
          %v1136 = vld [vmem:[%s5 + $0x2c] sm:$0xf]
          %v1137 = vld [vmem:[%s5 + $0x30] sm:$0xf]
          %v1138 = vld [vmem:[%s5 + $0x34] sm:$0xf]
          %v1139 = vld [vmem:[%s5 + $0x38] sm:$0xf]
          %v1140 = vld [vmem:[%s5 + $0x3c] sm:$0xf]
          %v1157 = vunpack.c.l.b16 %v1125
          %v1158 = vunpack.c.l.b16 %v1126
          %v1159 = vunpack.c.l.b16 %v1127
          %v1160 = vunpack.c.l.b16 %v1128
          %v1161 = vunpack.c.l.b16 %v1129
          %v1162 = vunpack.c.l.b16 %v1130
          %v1163 = vunpack.c.l.b16 %v1131
          %v1164 = vunpack.c.l.b16 %v1132
          %v1165 = vunpack.c.l.b16 %v1133
          %v1166 = vunpack.c.l.b16 %v1134
          %v1167 = vunpack.c.l.b16 %v1135
          %v1168 = vunpack.c.l.b16 %v1136
          %v1169 = vunpack.c.l.b16 %v1137
          %v1170 = vunpack.c.l.b16 %v1138
          %v1171 = vunpack.c.l.b16 %v1139
          %v1172 = vunpack.c.l.b16 %v1140
          %v1173 = vpack.c.b16 %v1158, %v1157
          %v1174 = vpack.c.b16 %v1160, %v1159
          %v1175 = vpack.c.b16 %v1162, %v1161
          %v1176 = vpack.c.b16 %v1164, %v1163
          %v1177 = vpack.c.b16 %v1166, %v1165
          %v1178 = vpack.c.b16 %v1168, %v1167
          %v1179 = vpack.c.b16 %v1170, %v1169
          %v1180 = vpack.c.b16 %v1172, %v1171
          %1189 = vmatprep.subr.bf16.mxu0 0
          %1190 = vmatpush1.bf16.msra.mxu0 %v1173
          %1191 = vmatprep.subr.bf16.mxu0 0
          %1192 = vmatpush1.bf16.msra.mxu0 %v1174
          %1193 = vmatprep.subr.bf16.mxu0 0
          %1194 = vmatpush1.bf16.msra.mxu0 %v1175
          %1195 = vmatprep.subr.bf16.mxu0 0
          %1196 = vmatpush1.bf16.msra.mxu0 %v1176
          %1197 = vmatprep.subr.bf16.mxu0 0
          %1198 = vmatpush1.bf16.msra.mxu0 %v1177
          %1199 = vmatprep.subr.bf16.mxu0 0
          %1200 = vmatpush1.bf16.msra.mxu0 %v1178
          %1201 = vmatprep.subr.bf16.mxu0 0
          %1202 = vmatpush1.bf16.msra.mxu0 %v1179
          %1203 = vmatprep.subr.bf16.mxu0 0
          %1204 = vmatpush1.bf16.msra.mxu0 %v1180
          %1205 = vmatprep.subr.bf16.mxu0 0
          %1206 = vmatpush1.bf16.msra.mxu0 0
          %1207 = vmatprep.subr.bf16.mxu0 0
          %1208 = vmatpush1.bf16.msra.mxu0 0
          %1209 = vmatprep.subr.bf16.mxu0 0
          %1210 = vmatpush1.bf16.msra.mxu0 0
          %1211 = vmatprep.subr.bf16.mxu0 0
          %1212 = vmatpush1.bf16.msra.mxu0 0
          %1213 = vmatprep.subr.bf16.mxu0 0
          %1214 = vmatpush1.bf16.msra.mxu0 0
          %1215 = vmatprep.subr.bf16.mxu0 0
          %1216 = vmatpush1.bf16.msra.mxu0 0
          %1217 = vmatprep.subr.bf16.mxu0 0
          %1218 = vmatpush1.bf16.msra.mxu0 0
          %1219 = vmatprep.subr.bf16.mxu0 0
          %1220 = vmatpush1.bf16.msra.mxu0 0
          %1221 = vmatprep.mubr.bf16.mxu0 0
          %1222 = vmatmul.mubr.bf16.gmra.mrb[0].mxu0 %v1101
          %v1223 = vpop.f32.mrb[0].mxu0
          %v1224 = vadd.f32 0.0, %v1223
          %v1225 = vpop.f32.mrb[0].mxu0
          %v1226 = vpop.f32.mrb[0].mxu0
          %v1227 = vadd.f32 0.0, %v1226
          %v1228 = vpop.f32.mrb[0].mxu0
          %1229 = vmatprep.mubr.bf16.mxu0 0
          %1230 = vmatmul.mubr.bf16.gmra.mrb[0].mxu0 %v1102
          %v1231 = vpop.f32.mrb[0].mxu0
          %v1232 = vadd.f32 0.0, %v1231
          %v1233 = vpop.f32.mrb[0].mxu0
          %v1234 = vpop.f32.mrb[0].mxu0
          %v1235 = vadd.f32 0.0, %v1234
          %v1236 = vpop.f32.mrb[0].mxu0
          %1237 = vmatprep.mubr.bf16.mxu0 0
          %1238 = vmatmul.mubr.bf16.gmra.mrb[0].mxu0 %v1103
          %v1239 = vpop.f32.mrb[0].mxu0
          %v1240 = vadd.f32 0.0, %v1239
          %v1241 = vpop.f32.mrb[0].mxu0
          %v1242 = vpop.f32.mrb[0].mxu0
          %v1243 = vadd.f32 0.0, %v1242
          %v1244 = vpop.f32.mrb[0].mxu0
          %1245 = vmatprep.mubr.bf16.mxu0 0
          %1246 = vmatmul.mubr.bf16.gmra.mrb[0].mxu0 %v1104
          %v1247 = vpop.f32.mrb[0].mxu0
          %v1248 = vadd.f32 0.0, %v1247
          %v1249 = vpop.f32.mrb[0].mxu0
          %v1250 = vpop.f32.mrb[0].mxu0
          %v1251 = vadd.f32 0.0, %v1250
          %v1252 = vpop.f32.mrb[0].mxu0
          %1253 = vmatprep.mubr.bf16.mxu0 0
          %1254 = vmatmul.mubr.bf16.gmra.mrb[0].mxu0 %v1105
          %v1255 = vpop.f32.mrb[0].mxu0
          %v1256 = vadd.f32 0.0, %v1255
          %v1257 = vpop.f32.mrb[0].mxu0
          %v1258 = vpop.f32.mrb[0].mxu0
          %v1259 = vadd.f32 0.0, %v1258
          %v1260 = vpop.f32.mrb[0].mxu0
          %1261 = vmatprep.mubr.bf16.mxu0 0
          %1262 = vmatmul.mubr.bf16.gmra.mrb[0].mxu0 %v1106
          %v1263 = vpop.f32.mrb[0].mxu0
          %v1264 = vadd.f32 0.0, %v1263
          %v1265 = vpop.f32.mrb[0].mxu0
          %v1266 = vpop.f32.mrb[0].mxu0
          %v1267 = vadd.f32 0.0, %v1266
          %v1268 = vpop.f32.mrb[0].mxu0
          %1269 = vmatprep.mubr.bf16.mxu0 0
          %1270 = vmatmul.mubr.bf16.gmra.mrb[0].mxu0 %v1107
          %v1271 = vpop.f32.mrb[0].mxu0
          %v1272 = vadd.f32 0.0, %v1271
          %v1273 = vpop.f32.mrb[0].mxu0
          %v1274 = vpop.f32.mrb[0].mxu0
          %v1275 = vadd.f32 0.0, %v1274
          %v1276 = vpop.f32.mrb[0].mxu0
          %1277 = vmatprep.mubr.bf16.mxu0 0
          %1278 = vmatmul.mubr.bf16.gmra.mrb[0].mxu0 %v1108
          %v1279 = vpop.f32.mrb[0].mxu0
          %v1280 = vadd.f32 0.0, %v1279
          %v1281 = vpop.f32.mrb[0].mxu0
          %v1282 = vpop.f32.mrb[0].mxu0
          %v1283 = vadd.f32 0.0, %v1282
          %v1284 = vpop.f32.mrb[0].mxu0
          %1285 = vdwg.mxu0
          %v1286 = vadd.f32 %v1109, %v1224
          %v1287 = vadd.f32 %v1110, %v1227
          %v1288 = vadd.f32 %v1111, %v1232
          %v1289 = vadd.f32 %v1112, %v1235
          %v1290 = vadd.f32 %v1113, %v1240
          %v1291 = vadd.f32 %v1114, %v1243
          %v1292 = vadd.f32 %v1115, %v1248
          %v1293 = vadd.f32 %v1116, %v1251
          %v1294 = vadd.f32 %v1117, %v1256
          %v1295 = vadd.f32 %v1118, %v1259
          %v1296 = vadd.f32 %v1119, %v1264
          %v1297 = vadd.f32 %v1120, %v1267
          %v1298 = vadd.f32 %v1121, %v1272
          %v1299 = vadd.f32 %v1122, %v1275
          %v1300 = vadd.f32 %v1123, %v1280
          %v1301 = vadd.f32 %v1124, %v1283
          %1302 = vst [vmem:[%s397] sm:$0xff] %v1286
          %1303 = vst [vmem:[%s397 + $0x8] sm:$0xff] %v1287
          %1304 = vst [vmem:[%s397 + $0x10] sm:$0xff] %v1288
          %1305 = vst [vmem:[%s397 + $0x18] sm:$0xff] %v1289
          %1306 = vst [vmem:[%s397 + $0x20] sm:$0xff] %v1290
          %1307 = vst [vmem:[%s397 + $0x28] sm:$0xff] %v1291
          %1308 = vst [vmem:[%s397 + $0x30] sm:$0xff] %v1292
          %1309 = vst [vmem:[%s397 + $0x38] sm:$0xff] %v1293
          %1310 = vst [vmem:[%s397 + $0x40] sm:$0xff] %v1294
          %1311 = vst [vmem:[%s397 + $0x48] sm:$0xff] %v1295
          %1312 = vst [vmem:[%s397 + $0x50] sm:$0xff] %v1296
          %1313 = vst [vmem:[%s397 + $0x58] sm:$0xff] %v1297
          %1314 = vst [vmem:[%s397 + $0x60] sm:$0xff] %v1298
          %1315 = vst [vmem:[%s397 + $0x68] sm:$0xff] %v1299
          %1316 = vst [vmem:[%s397 + $0x70] sm:$0xff] %v1300
          %1317 = vst [vmem:[%s397 + $0x78] sm:$0xff] %v1301
        $region83: #{graphsage_forward.3} parent=66 // pred_fallthru
          _
        %s1318 = smul.u32 16, %s22
        %p1319 = scmp.lt.s32.totalorder %s1318, 63
        %s1320 = scalar_select %p1319, %s1318, 63
        %s1321 = smul.addr %s1320, 8
        %s1322 = scalar_lea.vmem %s7, %s1321
        // Predicated region
        $region84: #{graphsage_forward.3} parent=66 // pred_check
          %p1323 = pneg %p217
        $region85: #{graphsage_forward.3} parent=66 // pred_check_branch
          %1325 = sbr.rel (%p1323) target = $region87
        $region86: #{graphsage_forward.3} parent=66 // pred_region
          %s1326 = smul.u32 16, %s22
        $region87: #{graphsage_forward.3} parent=66 // pred_fallthru
          _
      $region67: #{graphsage_forward.3} parent=5 // pred_fallthru
        _
      %p1327 = scmp.le.s32.totalorder 2, %s13
      // Predicated region
      $region88: #{graphsage_forward.3} parent=5 // pred_check
        %p1328 = pneg %p1327
      $region89: #{graphsage_forward.3} parent=5 // pred_check_branch
        %1330 = sbr.rel (%p1328) target = $region91
      $region90: #{graphsage_forward.3} parent=5 // pred_region
        %s1331 = ssub.s32 %s13, 2
        // Predicated region
        $region92: #{graphsage_forward.3} parent=90 // pred_check
          %p1332 = pneg %p223
        $region93: #{graphsage_forward.3} parent=90 // pred_check_branch
          %1334 = sbr.rel (%p1332) target = $region95
        $region94: #{graphsage_forward.3} parent=90 // pred_region
          %s1335 = smul.u32 16, %s24
          %p1336 = scmp.lt.s32.totalorder %s1335, 63
          %s1337 = scalar_select %p1336, %s1335, 63
          %s1338 = smul.addr %s1337, 8
          %s1339 = scalar_lea.vmem %s7, %s1338
        $region95: #{graphsage_forward.3} parent=90 // pred_fallthru
          _
      $region91: #{graphsage_forward.3} parent=5 // pred_fallthru
        _
    $region6: #{graphsage_forward.3} parent=1 // loop_footer
      %s17 = sadd.s32 1, %s13
    $region7: #{graphsage_forward.3} parent=1 // loop_footer_branch
      %12 = sbr.rel target = $region3
    $region8: #{graphsage_forward.3} parent=1 // loop_exit
      _

// kernel: graphsage_forward.2
$region0: #{graphsage_forward.2}
  #allocation0 [shape = 'u32[]', space=smem, size = 0x4, offset = 0x4, fixed_abs, tag = 'smem constant byte address 0x4 - core index']
  #allocation1 [shape = 'u32[144,128]{1,0:T(1,128)}', space=vmem, size = 0x12000, scoped, tag = 'internal scratch']
  #allocation2 [shape = 'f32[128,128]{1,0:T(8,128)}', space=vmem, size = 0x10000, scoped, tag = 'scratch operand']
  #allocation3 [shape = 'f32[128,128]{1,0:T(8,128)}', space=vmem, size = 0x10000, scoped, tag = 'scratch operand']
  %s0 = inlined_call_operand.vmem [shape: s8[512,512], index: 0, kind: input, shape index: {}]
  %s1 = inlined_call_operand.vmem [shape: bf16[512,128], index: 1, kind: input, shape index: {}, may-alias: {1,2}]
  %s2 = inlined_call_operand.vmem [shape: bf16[512,128], index: 2, kind: input, shape index: {}, may-alias: {1,2}]
  %s3 = inlined_call_operand.vmem [shape: f32[512,1], index: 3, kind: input, shape index: {}]
  %s4 = inlined_call_operand.vmem [shape: bf16[128,128], index: 4, kind: input, shape index: {}]
  %s5 = inlined_call_operand.vmem [shape: bf16[128,128], index: 5, kind: input, shape index: {}]
  %s6 = inlined_call_operand.vmem [shape: f32[1,128], index: 6, kind: input, shape index: {}]
  %s7 = inlined_call_operand.vmem [shape: bf16[512,128], index: 7, kind: output, shape index: {}]
  %s8 = sld [smem:[#allocation0]]
  $region96: #{graphsage_forward.2} parent=0
    _
  %s10 = ssub.s32 1, %s8
  %s11 = scalar_select 0, %s10, %s8
  $region1: #{graphsage_forward.2} parent=0
    #allocation4 [shape = 'u8[65536]{0}', space=vmem, size = 0x10000, scoped, tag = 'input window, operand 0']
    loop: start=0, step=1, limit=10
    $region2: #{graphsage_forward.2} parent=1 // loop_pre_header
      _
    $region3: #{graphsage_forward.2} parent=1 // loop_header
      %s13 = sphi 0, %s17
      %p14 = scmp.ge.s32.totalorder %s13, 10
      %s20 = sphi 0, %s32
      %s21 = sphi 0, %s28
      %s22 = sphi 0, %s20
      %s23 = sphi 0, %s21
      %s24 = sphi 0, %s22
      %s25 = sphi 0, %s23
      %s37 = sphi 0, %s39
      %s40 = sphi 0, %s37
      %s41 = sphi 0, %s40
      %s57 = sphi 0, %s41
      %s63 = sphi 0, %s65
      %s66 = sphi 0, %s63
      %s67 = sphi 0, %s66
      %s83 = sphi 0, %s67
      %s89 = sphi 0, %s91
      %s92 = sphi 0, %s89
      %s93 = sphi 0, %s92
      %s109 = sphi 0, %s93
      %s115 = sphi 0, %s117
      %s118 = sphi 0, %s115
      %s119 = sphi 0, %s118
      %s135 = sphi 0, %s119
      %s139 = sphi 0, %s139
      %s141 = sphi 0, %s139
      %s142 = sphi 0, %s141
      %s156 = sphi 0, %s142
      %s160 = sphi 0, %s160
      %s162 = sphi 0, %s160
      %s163 = sphi 0, %s162
      %s177 = sphi 0, %s163
      %s181 = sphi 0, %s181
      %s183 = sphi 0, %s181
      %s184 = sphi 0, %s183
      %s198 = sphi 0, %s184
      %s204 = sphi 0, %s206
      %s207 = sphi 0, %s204
      %s208 = sphi 0, %s207
      %s224 = sphi 0, %s208
    $region4: #{graphsage_forward.2} parent=1 // loop_header_branch
      %16 = sbr.rel (%p14) target = $region8
    $region5: #{graphsage_forward.2} parent=1 // loop_body
      %s18 = ssub.s32 %s13, 1
      %s19 = ssub.s32 %s13, 2
      %s26 = sadd.s32 1, %s21
      %p27 = scmp.ge.s32.totalorder %s26, 2
      %s28 = scalar_select %p27, 0, %s26
      %s29 = sadd.s32 1, %s20
      %s30 = scalar_select %p27, %s29, %s20
      %p31 = scmp.ge.s32.totalorder %s30, 4
      %s32 = scalar_select %p31, 0, %s30
      %s33 = ssub.s32 %s20, %s32
      %s34 = ssub.s32 %s21, %s28
      %s35 = sor.u32 %s33, %s34
      %p36 = scmp.eq.s32.totalorder %s35, 0
      %s38 = sadd.s32 %s37, 1
      %s39 = scalar_select %p36, %s37, %s38
      %p42 = pneg %p36
      %p43 = scmp.eq.s32.totalorder %s13, 7
      %p44 = por %p42, %p43
      %p45 = scmp.ne.s32.totalorder %s37, %s40
      %p46 = scmp.eq.s32.totalorder %s13, 0
      %p47 = por %p45, %p46
      %p48 = scmp.ne.s32.totalorder %s37, %s40
      %p49 = scmp.eq.s32.totalorder %s18, 7
      %p50 = por %p48, %p49
      %p51 = scmp.ne.s32.totalorder %s40, %s41
      %p52 = scmp.eq.s32.totalorder %s18, 0
      %p53 = por %p51, %p52
      %p54 = scmp.ne.s32.totalorder %s40, %s41
      %p55 = scmp.eq.s32.totalorder %s19, 7
      %p56 = por %p54, %p55
      %p58 = scmp.ne.s32.totalorder %s41, %s57
      %p59 = scmp.eq.s32.totalorder %s19, 0
      %p60 = por %p58, %p59
      %s61 = ssub.s32 %s21, %s28
      %p62 = scmp.eq.s32.totalorder %s61, 0
      %s64 = sadd.s32 %s63, 1
      %s65 = scalar_select %p62, %s63, %s64
      %p68 = pneg %p62
      %p69 = scmp.eq.s32.totalorder %s13, 7
      %p70 = por %p68, %p69
      %p71 = scmp.ne.s32.totalorder %s63, %s66
      %p72 = scmp.eq.s32.totalorder %s13, 0
      %p73 = por %p71, %p72
      %p74 = scmp.ne.s32.totalorder %s63, %s66
      %p75 = scmp.eq.s32.totalorder %s18, 7
      %p76 = por %p74, %p75
      %p77 = scmp.ne.s32.totalorder %s66, %s67
      %p78 = scmp.eq.s32.totalorder %s18, 0
      %p79 = por %p77, %p78
      %p80 = scmp.ne.s32.totalorder %s66, %s67
      %p81 = scmp.eq.s32.totalorder %s19, 7
      %p82 = por %p80, %p81
      %p84 = scmp.ne.s32.totalorder %s67, %s83
      %p85 = scmp.eq.s32.totalorder %s19, 0
      %p86 = por %p84, %p85
      %s87 = ssub.s32 %s20, %s32
      %p88 = scmp.eq.s32.totalorder %s87, 0
      %s90 = sadd.s32 %s89, 1
      %s91 = scalar_select %p88, %s89, %s90
      %p94 = pneg %p88
      %p95 = scmp.eq.s32.totalorder %s13, 7
      %p96 = por %p94, %p95
      %p97 = scmp.ne.s32.totalorder %s89, %s92
      %p98 = scmp.eq.s32.totalorder %s13, 0
      %p99 = por %p97, %p98
      %p100 = scmp.ne.s32.totalorder %s89, %s92
      %p101 = scmp.eq.s32.totalorder %s18, 7
      %p102 = por %p100, %p101
      %p103 = scmp.ne.s32.totalorder %s92, %s93
      %p104 = scmp.eq.s32.totalorder %s18, 0
      %p105 = por %p103, %p104
      %p106 = scmp.ne.s32.totalorder %s92, %s93
      %p107 = scmp.eq.s32.totalorder %s19, 7
      %p108 = por %p106, %p107
      %p110 = scmp.ne.s32.totalorder %s93, %s109
      %p111 = scmp.eq.s32.totalorder %s19, 0
      %p112 = por %p110, %p111
      %s113 = ssub.s32 %s20, %s32
      %p114 = scmp.eq.s32.totalorder %s113, 0
      %s116 = sadd.s32 %s115, 1
      %s117 = scalar_select %p114, %s115, %s116
      %p120 = pneg %p114
      %p121 = scmp.eq.s32.totalorder %s13, 7
      %p122 = por %p120, %p121
      %p123 = scmp.ne.s32.totalorder %s115, %s118
      %p124 = scmp.eq.s32.totalorder %s13, 0
      %p125 = por %p123, %p124
      %p126 = scmp.ne.s32.totalorder %s115, %s118
      %p127 = scmp.eq.s32.totalorder %s18, 7
      %p128 = por %p126, %p127
      %p129 = scmp.ne.s32.totalorder %s118, %s119
      %p130 = scmp.eq.s32.totalorder %s18, 0
      %p131 = por %p129, %p130
      %p132 = scmp.ne.s32.totalorder %s118, %s119
      %p133 = scmp.eq.s32.totalorder %s19, 7
      %p134 = por %p132, %p133
      %p136 = scmp.ne.s32.totalorder %s119, %s135
      %p137 = scmp.eq.s32.totalorder %s19, 0
      %p138 = por %p136, %p137
      %s140 = sadd.s32 %s139, 1
      %p143 = scmp.eq.s32.totalorder %s13, 7
      %p144 = scmp.ne.s32.totalorder %s139, %s141
      %p145 = scmp.eq.s32.totalorder %s13, 0
      %p146 = por %p144, %p145
      %p147 = scmp.ne.s32.totalorder %s139, %s141
      %p148 = scmp.eq.s32.totalorder %s18, 7
      %p149 = por %p147, %p148
      %p150 = scmp.ne.s32.totalorder %s141, %s142
      %p151 = scmp.eq.s32.totalorder %s18, 0
      %p152 = por %p150, %p151
      %p153 = scmp.ne.s32.totalorder %s141, %s142
      %p154 = scmp.eq.s32.totalorder %s19, 7
      %p155 = por %p153, %p154
      %p157 = scmp.ne.s32.totalorder %s142, %s156
      %p158 = scmp.eq.s32.totalorder %s19, 0
      %p159 = por %p157, %p158
      %s161 = sadd.s32 %s160, 1
      %p164 = scmp.eq.s32.totalorder %s13, 7
      %p165 = scmp.ne.s32.totalorder %s160, %s162
      %p166 = scmp.eq.s32.totalorder %s13, 0
      %p167 = por %p165, %p166
      %p168 = scmp.ne.s32.totalorder %s160, %s162
      %p169 = scmp.eq.s32.totalorder %s18, 7
      %p170 = por %p168, %p169
      %p171 = scmp.ne.s32.totalorder %s162, %s163
      %p172 = scmp.eq.s32.totalorder %s18, 0
      %p173 = por %p171, %p172
      %p174 = scmp.ne.s32.totalorder %s162, %s163
      %p175 = scmp.eq.s32.totalorder %s19, 7
      %p176 = por %p174, %p175
      %p178 = scmp.ne.s32.totalorder %s163, %s177
      %p179 = scmp.eq.s32.totalorder %s19, 0
      %p180 = por %p178, %p179
      %s182 = sadd.s32 %s181, 1
      %p185 = scmp.eq.s32.totalorder %s13, 7
      %p186 = scmp.ne.s32.totalorder %s181, %s183
      %p187 = scmp.eq.s32.totalorder %s13, 0
      %p188 = por %p186, %p187
      %p189 = scmp.ne.s32.totalorder %s181, %s183
      %p190 = scmp.eq.s32.totalorder %s18, 7
      %p191 = por %p189, %p190
      %p192 = scmp.ne.s32.totalorder %s183, %s184
      %p193 = scmp.eq.s32.totalorder %s18, 0
      %p194 = por %p192, %p193
      %p195 = scmp.ne.s32.totalorder %s183, %s184
      %p196 = scmp.eq.s32.totalorder %s19, 7
      %p197 = por %p195, %p196
      %p199 = scmp.ne.s32.totalorder %s184, %s198
      %p200 = scmp.eq.s32.totalorder %s19, 0
      %p201 = por %p199, %p200
      %s202 = ssub.s32 %s20, %s32
      %p203 = scmp.eq.s32.totalorder %s202, 0
      %s205 = sadd.s32 %s204, 1
      %s206 = scalar_select %p203, %s204, %s205
      %p209 = pneg %p203
      %p210 = scmp.eq.s32.totalorder %s13, 7
      %p211 = por %p209, %p210
      %p212 = scmp.ne.s32.totalorder %s204, %s207
      %p213 = scmp.eq.s32.totalorder %s13, 0
      %p214 = por %p212, %p213
      %p215 = scmp.ne.s32.totalorder %s204, %s207
      %p216 = scmp.eq.s32.totalorder %s18, 7
      %p217 = por %p215, %p216
      %p218 = scmp.ne.s32.totalorder %s207, %s208
      %p219 = scmp.eq.s32.totalorder %s18, 0
      %p220 = por %p218, %p219
      %p221 = scmp.ne.s32.totalorder %s207, %s208
      %p222 = scmp.eq.s32.totalorder %s19, 7
      %p223 = por %p221, %p222
      %p225 = scmp.ne.s32.totalorder %s208, %s224
      %p226 = scmp.eq.s32.totalorder %s19, 0
      %p227 = por %p225, %p226
      %p228 = scmp.le.s32.totalorder 1, %s13
      %p229 = scmp.lt.s32.totalorder %s13, 9
      %p230 = pnand %p228, %p229
      %p231 = pneg %p230
      // Predicated region
      $region9: #{graphsage_forward.2} parent=5 // pred_check
        _
      $region10: #{graphsage_forward.2} parent=5 // pred_check_branch
        %233 = sbr.rel (%p230) target = $region12
      $region11: #{graphsage_forward.2} parent=5 // pred_region
        %s234 = ssub.s32 %s13, 1
        // Predicated region
        $region13: #{graphsage_forward.2} parent=11 // pred_check
          %p235 = pneg %p152
        $region14: #{graphsage_forward.2} parent=11 // pred_check_branch
          %237 = sbr.rel (%p235) target = $region16
        $region15: #{graphsage_forward.2} parent=11 // pred_region
          _
        $region16: #{graphsage_forward.2} parent=11 // pred_fallthru
          _
        // Predicated region
        $region17: #{graphsage_forward.2} parent=11 // pred_check
          %p238 = pneg %p173
        $region18: #{graphsage_forward.2} parent=11 // pred_check_branch
          %240 = sbr.rel (%p238) target = $region20
        $region19: #{graphsage_forward.2} parent=11 // pred_region
          _
        $region20: #{graphsage_forward.2} parent=11 // pred_fallthru
          _
        // Predicated region
        $region21: #{graphsage_forward.2} parent=11 // pred_check
          %p241 = pneg %p194
        $region22: #{graphsage_forward.2} parent=11 // pred_check_branch
          %243 = sbr.rel (%p241) target = $region24
        $region23: #{graphsage_forward.2} parent=11 // pred_region
          _
        $region24: #{graphsage_forward.2} parent=11 // pred_fallthru
          _
      $region12: #{graphsage_forward.2} parent=5 // pred_fallthru
        _
      %p244 = scmp.lt.s32.totalorder %s13, 8
      // Predicated region
      $region25: #{graphsage_forward.2} parent=5 // pred_check
        %p245 = pneg %p244
      $region26: #{graphsage_forward.2} parent=5 // pred_check_branch
        %247 = sbr.rel (%p245) target = $region28
      $region27: #{graphsage_forward.2} parent=5 // pred_region
        // Predicated region
        $region29: #{graphsage_forward.2} parent=27 // pred_check
          %p248 = pneg %p47
        $region30: #{graphsage_forward.2} parent=27 // pred_check_branch
          %250 = sbr.rel (%p248) target = $region32
        $region31: #{graphsage_forward.2} parent=27 // pred_region
          %s251 = sand.u32 %s37, 1
          %s252 = sand.u32 %s37, 1
          %s253 = smul.addr %s252, 64
          %s254 = scalar_lea.vmem [#allocation4], %s253
          %s255 = smul.u32 4, %s20
          %s256 = smul.u32 2, %s21
          %s257 = smul.addr %s255, 4
          %s258 = sadd.s32 %s256, %s257
          %s259 = smul.addr %s258, 8
          %s260 = scalar_lea.vmem %s0, %s259
          // Predicated region
          $region33: #{graphsage_forward.2} parent=31 // pred_check
            _
          $region34: #{graphsage_forward.2} parent=31 // pred_check_branch
            %262 = sbr.rel (0) target = $region36
          $region35: #{graphsage_forward.2} parent=31 // pred_region
            // Predicated region
            $region37: #{graphsage_forward.2} parent=35 // pred_check
              _
            $region38: #{graphsage_forward.2} parent=35 // pred_check_branch
              %264 = sbr.rel (0) target = $region40
            $region39: #{graphsage_forward.2} parent=35 // pred_region
              loop: start=0, step=1, limit=1
              $region41: #{graphsage_forward.2} parent=39 // loop_pre_header
                _
              $region42: #{graphsage_forward.2} parent=39 // loop_header
                %s266 = sphi 0, %s270
                %p267 = scmp.ge.s32.totalorder %s266, 1
                %s271 = sphi %s260, %s260
                %s272 = sphi %s254, %s254
              $region43: #{graphsage_forward.2} parent=39 // loop_header_branch
                %269 = sbr.rel (%p267) target = $region47
              $region44: #{graphsage_forward.2} parent=39 // loop_body
                %v273 = vld [vmem:[%s271] sm:$0xff]
                %274 = vst [vmem:[%s272] sm:$0xff] %v273
                %v275 = vld [vmem:[%s271 + $0x8] sm:$0xff]
                %276 = vst [vmem:[%s272 + $0x8] sm:$0xff] %v275
                %v277 = vld [vmem:[%s271 + $0x20] sm:$0xff]
                %278 = vst [vmem:[%s272 + $0x10] sm:$0xff] %v277
                %v279 = vld [vmem:[%s271 + $0x28] sm:$0xff]
                %280 = vst [vmem:[%s272 + $0x18] sm:$0xff] %v279
                %v281 = vld [vmem:[%s271 + $0x40] sm:$0xff]
                %282 = vst [vmem:[%s272 + $0x20] sm:$0xff] %v281
                %v283 = vld [vmem:[%s271 + $0x48] sm:$0xff]
                %284 = vst [vmem:[%s272 + $0x28] sm:$0xff] %v283
                %v285 = vld [vmem:[%s271 + $0x60] sm:$0xff]
                %286 = vst [vmem:[%s272 + $0x30] sm:$0xff] %v285
                %v287 = vld [vmem:[%s271 + $0x68] sm:$0xff]
                %288 = vst [vmem:[%s272 + $0x38] sm:$0xff] %v287
              $region45: #{graphsage_forward.2} parent=39 // loop_footer
                %s270 = sadd.s32 1, %s266
              $region46: #{graphsage_forward.2} parent=39 // loop_footer_branch
                %265 = sbr.rel target = $region42
              $region47: #{graphsage_forward.2} parent=39 // loop_exit
                _
            $region40: #{graphsage_forward.2} parent=35 // pred_fallthru
              _
            // Predicated region
            $region48: #{graphsage_forward.2} parent=35 // pred_check
              _
            $region49: #{graphsage_forward.2} parent=35 // pred_check_branch
              %290 = sbr.rel target = $region51
            $region50: #{graphsage_forward.2} parent=35 // pred_region
              _
            $region51: #{graphsage_forward.2} parent=35 // pred_fallthru
              _
          $region36: #{graphsage_forward.2} parent=31 // pred_fallthru
            _
          %291 = vnop
        $region32: #{graphsage_forward.2} parent=27 // pred_fallthru
          _
        // Predicated region
        $region52: #{graphsage_forward.2} parent=27 // pred_check
          %p292 = pneg %p73
        $region53: #{graphsage_forward.2} parent=27 // pred_check_branch
          %294 = sbr.rel (%p292) target = $region55
        $region54: #{graphsage_forward.2} parent=27 // pred_region
          %s295 = smul.u32 32, %s21
          %p296 = scmp.lt.s32.totalorder %s295, 63
          %s297 = scalar_select %p296, %s295, 63
          %s298 = smul.addr %s297, 4
          %s299 = scalar_lea.vmem %s1, %s298
          %s300 = smul.u32 32, %s21
        $region55: #{graphsage_forward.2} parent=27 // pred_fallthru
          _
        // Predicated region
        $region56: #{graphsage_forward.2} parent=27 // pred_check
          %p301 = pneg %p99
        $region57: #{graphsage_forward.2} parent=27 // pred_check_branch
          %303 = sbr.rel (%p301) target = $region59
        $region58: #{graphsage_forward.2} parent=27 // pred_region
          %s304 = smul.u32 16, %s20
          %p305 = scmp.lt.s32.totalorder %s304, 63
          %s306 = scalar_select %p305, %s304, 63
          %s307 = smul.addr %s306, 4
          %s308 = scalar_lea.vmem %s2, %s307
          %s309 = smul.u32 16, %s20
        $region59: #{graphsage_forward.2} parent=27 // pred_fallthru
          _
        // Predicated region
        $region60: #{graphsage_forward.2} parent=27 // pred_check
          %p310 = pneg %p125
        $region61: #{graphsage_forward.2} parent=27 // pred_check_branch
          %312 = sbr.rel (%p310) target = $region63
        $region62: #{graphsage_forward.2} parent=27 // pred_region
          %s313 = smul.u32 16, %s20
          %p314 = scmp.lt.s32.totalorder %s313, 63
          %s315 = scalar_select %p314, %s313, 63
          %s316 = smul.addr %s315, 8
          %s317 = scalar_lea.vmem %s3, %s316
          %s318 = smul.u32 16, %s20
        $region63: #{graphsage_forward.2} parent=27 // pred_fallthru
          _
      $region28: #{graphsage_forward.2} parent=5 // pred_fallthru
        _
      %p319 = scmp.le.s32.totalorder 1, %s13
      %p320 = scmp.lt.s32.totalorder %s13, 9
      %p321 = pnand %p319, %p320
      %p322 = pneg %p321
      // Predicated region
      $region64: #{graphsage_forward.2} parent=5 // pred_check
        _
      $region65: #{graphsage_forward.2} parent=5 // pred_check_branch
        %324 = sbr.rel (%p321) target = $region67
      $region66: #{graphsage_forward.2} parent=5 // pred_region
        %s325 = ssub.s32 %s13, 1
        %s326 = sand.u32 %s40, 1
        %s327 = sand.u32 %s40, 1
        %s328 = smul.addr %s327, 64
        %s329 = scalar_lea.vmem [#allocation4], %s328
        // Predicated region
        $region68: #{graphsage_forward.2} parent=66 // pred_check
          %p330 = pneg %p53
        $region69: #{graphsage_forward.2} parent=66 // pred_check_branch
          %332 = sbr.rel (%p330) target = $region71
        $region70: #{graphsage_forward.2} parent=66 // pred_region
          _
        $region71: #{graphsage_forward.2} parent=66 // pred_fallthru
          _
        %s333 = sand.u32 %s40, 1
        %s334 = sand.u32 %s40, 1
        %s335 = smul.addr %s334, 64
        %s336 = scalar_lea.vmem [#allocation4], %s335
        %p337 = pneg %p53
        %p338 = pneg %p50
        %s339 = smul.u32 32, %s23
        %p340 = scmp.lt.s32.totalorder %s339, 63
        %s341 = scalar_select %p340, %s339, 63
        %s342 = smul.addr %s341, 4
        %s343 = scalar_lea.vmem %s1, %s342
        %p344 = pneg %p79
        %p345 = pneg %p76
        %s346 = smul.u32 16, %s22
        %p347 = scmp.lt.s32.totalorder %s346, 63
        %s348 = scalar_select %p347, %s346, 63
        %s349 = smul.addr %s348, 4
        %s350 = scalar_lea.vmem %s2, %s349
        %p351 = pneg %p105
        %p352 = pneg %p102
        %s353 = smul.u32 16, %s22
        %p354 = scmp.lt.s32.totalorder %s353, 63
        %s355 = scalar_select %p354, %s353, 63
        %s356 = smul.addr %s355, 8
        %s357 = scalar_lea.vmem %s3, %s356
        %p358 = pneg %p131
        %p359 = pneg %p128
        %p360 = pneg %p152
        %p361 = pneg %p149
        %p362 = pneg %p173
        %p363 = pneg %p170
        %p364 = pneg %p194
        %p365 = pneg %p191
        %p366 = pneg %p220
        %p367 = pneg %p217
        %s368 = smul.u32 16, %s22
        %p369 = scmp.lt.s32.totalorder %s368, 63
        %s370 = scalar_select %p369, %s368, 63
        %s371 = smul.addr %s370, 4
        %s372 = scalar_lea.vmem %s7, %s371
        %s373 = smul.u32 4, %s22
        %s374 = smul.u32 2, %s23
        %s375 = smul.u32 32, %s23
        %p376 = scmp.lt.s32.totalorder %s375, 63
        %s377 = scalar_select %p376, %s375, 63
        %s378 = smul.addr %s377, 4
        %s379 = scalar_lea.vmem %s1, %s378
        %s380 = smul.u32 32, %s23
        %s381 = smul.u32 16, %s22
        %p382 = scmp.lt.s32.totalorder %s381, 63
        %s383 = scalar_select %p382, %s381, 63
        %s384 = smul.addr %s383, 4
        %s385 = scalar_lea.vmem %s2, %s384
        %s386 = smul.u32 16, %s22
        %s387 = smul.u32 16, %s22
        %p388 = scmp.lt.s32.totalorder %s387, 63
        %s389 = scalar_select %p388, %s387, 63
        %s390 = smul.addr %s389, 8
        %s391 = scalar_lea.vmem %s3, %s390
        %s392 = smul.u32 16, %s22
        %s393 = smul.u32 16, %s22
        %p394 = scmp.lt.s32.totalorder %s393, 63
        %s395 = scalar_select %p394, %s393, 63
        %s396 = smul.addr %s395, 4
        %s397 = scalar_lea.vmem %s7, %s396
        %s398 = smul.u32 16, %s22
        %v400 = vld [vmem:[%s329] sm:$0xff]
        %v401 = vld [vmem:[%s329 + $0x8] sm:$0xff]
        %v402 = vld [vmem:[%s329 + $0x10] sm:$0xff]
        %v403 = vld [vmem:[%s329 + $0x18] sm:$0xff]
        %v404 = vld [vmem:[%s329 + $0x20] sm:$0xff]
        %v405 = vld [vmem:[%s329 + $0x28] sm:$0xff]
        %v406 = vld [vmem:[%s329 + $0x30] sm:$0xff]
        %v407 = vld [vmem:[%s329 + $0x38] sm:$0xff]
        %v408 = vunpack.c.l.s8.bf16 %v400
        %v409 = vunpack.c.l.s8.bf16 %v401
        %v410 = vunpack.c.h.s8.bf16 %v400
        %v411 = vunpack.c.h.s8.bf16 %v401
        %v412 = vunpack.c.l.s8.bf16 %v402
        %v413 = vunpack.c.l.s8.bf16 %v403
        %v414 = vunpack.c.h.s8.bf16 %v402
        %v415 = vunpack.c.h.s8.bf16 %v403
        %v416 = vunpack.c.l.s8.bf16 %v404
        %v417 = vunpack.c.l.s8.bf16 %v405
        %v418 = vunpack.c.h.s8.bf16 %v404
        %v419 = vunpack.c.h.s8.bf16 %v405
        %v420 = vunpack.c.l.s8.bf16 %v406
        %v421 = vunpack.c.l.s8.bf16 %v407
        %v422 = vunpack.c.h.s8.bf16 %v406
        %v423 = vunpack.c.h.s8.bf16 %v407
        %v424 = vld [vmem:[%s379] sm:$0xf]
        %v425 = vld [vmem:[%s379 + $0x4] sm:$0xf]
        %v426 = vld [vmem:[%s379 + $0x8] sm:$0xf]
        %v427 = vld [vmem:[%s379 + $0xc] sm:$0xf]
        %v428 = vld [vmem:[%s379 + $0x10] sm:$0xf]
        %v429 = vld [vmem:[%s379 + $0x14] sm:$0xf]
        %v430 = vld [vmem:[%s379 + $0x18] sm:$0xf]
        %v431 = vld [vmem:[%s379 + $0x1c] sm:$0xf]
        %v432 = vld [vmem:[%s379 + $0x20] sm:$0xf]
        %v433 = vld [vmem:[%s379 + $0x24] sm:$0xf]
        %v434 = vld [vmem:[%s379 + $0x28] sm:$0xf]
        %v435 = vld [vmem:[%s379 + $0x2c] sm:$0xf]
        %v436 = vld [vmem:[%s379 + $0x30] sm:$0xf]
        %v437 = vld [vmem:[%s379 + $0x34] sm:$0xf]
        %v438 = vld [vmem:[%s379 + $0x38] sm:$0xf]
        %v439 = vld [vmem:[%s379 + $0x3c] sm:$0xf]
        %v440 = vld [vmem:[%s379 + $0x40] sm:$0xf]
        %v441 = vld [vmem:[%s379 + $0x44] sm:$0xf]
        %v442 = vld [vmem:[%s379 + $0x48] sm:$0xf]
        %v443 = vld [vmem:[%s379 + $0x4c] sm:$0xf]
        %v444 = vld [vmem:[%s379 + $0x50] sm:$0xf]
        %v445 = vld [vmem:[%s379 + $0x54] sm:$0xf]
        %v446 = vld [vmem:[%s379 + $0x58] sm:$0xf]
        %v447 = vld [vmem:[%s379 + $0x5c] sm:$0xf]
        %v448 = vld [vmem:[%s379 + $0x60] sm:$0xf]
        %v449 = vld [vmem:[%s379 + $0x64] sm:$0xf]
        %v450 = vld [vmem:[%s379 + $0x68] sm:$0xf]
        %v451 = vld [vmem:[%s379 + $0x6c] sm:$0xf]
        %v452 = vld [vmem:[%s379 + $0x70] sm:$0xf]
        %v453 = vld [vmem:[%s379 + $0x74] sm:$0xf]
        %v454 = vld [vmem:[%s379 + $0x78] sm:$0xf]
        %v455 = vld [vmem:[%s379 + $0x7c] sm:$0xf]
        %v488 = vunpack.c.l.b16 %v424
        %v489 = vunpack.c.l.b16 %v425
        %v490 = vunpack.c.l.b16 %v426
        %v491 = vunpack.c.l.b16 %v427
        %v492 = vunpack.c.l.b16 %v428
        %v493 = vunpack.c.l.b16 %v429
        %v494 = vunpack.c.l.b16 %v430
        %v495 = vunpack.c.l.b16 %v431
        %v496 = vunpack.c.l.b16 %v432
        %v497 = vunpack.c.l.b16 %v433
        %v498 = vunpack.c.l.b16 %v434
        %v499 = vunpack.c.l.b16 %v435
        %v500 = vunpack.c.l.b16 %v436
        %v501 = vunpack.c.l.b16 %v437
        %v502 = vunpack.c.l.b16 %v438
        %v503 = vunpack.c.l.b16 %v439
        %v504 = vunpack.c.l.b16 %v440
        %v505 = vunpack.c.l.b16 %v441
        %v506 = vunpack.c.l.b16 %v442
        %v507 = vunpack.c.l.b16 %v443
        %v508 = vunpack.c.l.b16 %v444
        %v509 = vunpack.c.l.b16 %v445
        %v510 = vunpack.c.l.b16 %v446
        %v511 = vunpack.c.l.b16 %v447
        %v512 = vunpack.c.l.b16 %v448
        %v513 = vunpack.c.l.b16 %v449
        %v514 = vunpack.c.l.b16 %v450
        %v515 = vunpack.c.l.b16 %v451
        %v516 = vunpack.c.l.b16 %v452
        %v517 = vunpack.c.l.b16 %v453
        %v518 = vunpack.c.l.b16 %v454
        %v519 = vunpack.c.l.b16 %v455
        %v520 = vpack.c.b16 %v489, %v488
        %v521 = vpack.c.b16 %v491, %v490
        %v522 = vpack.c.b16 %v493, %v492
        %v523 = vpack.c.b16 %v495, %v494
        %v524 = vpack.c.b16 %v497, %v496
        %v525 = vpack.c.b16 %v499, %v498
        %v526 = vpack.c.b16 %v501, %v500
        %v527 = vpack.c.b16 %v503, %v502
        %v528 = vpack.c.b16 %v505, %v504
        %v529 = vpack.c.b16 %v507, %v506
        %v530 = vpack.c.b16 %v509, %v508
        %v531 = vpack.c.b16 %v511, %v510
        %v532 = vpack.c.b16 %v513, %v512
        %v533 = vpack.c.b16 %v515, %v514
        %v534 = vpack.c.b16 %v517, %v516
        %v535 = vpack.c.b16 %v519, %v518
        %552 = vmatprep.subr.bf16.mxu0 0
        %553 = vmatpush1.bf16.msra.mxu0 %v520
        %554 = vmatprep.subr.bf16.mxu0 0
        %555 = vmatpush1.bf16.msra.mxu0 %v521
        %556 = vmatprep.subr.bf16.mxu0 0
        %557 = vmatpush1.bf16.msra.mxu0 %v522
        %558 = vmatprep.subr.bf16.mxu0 0
        %559 = vmatpush1.bf16.msra.mxu0 %v523
        %560 = vmatprep.subr.bf16.mxu0 0
        %561 = vmatpush1.bf16.msra.mxu0 %v524
        %562 = vmatprep.subr.bf16.mxu0 0
        %563 = vmatpush1.bf16.msra.mxu0 %v525
        %564 = vmatprep.subr.bf16.mxu0 0
        %565 = vmatpush1.bf16.msra.mxu0 %v526
        %566 = vmatprep.subr.bf16.mxu0 0
        %567 = vmatpush1.bf16.msra.mxu0 %v527
        %568 = vmatprep.subr.bf16.mxu0 0
        %569 = vmatpush1.bf16.msra.mxu0 %v528
        %570 = vmatprep.subr.bf16.mxu0 0
        %571 = vmatpush1.bf16.msra.mxu0 %v529
        %572 = vmatprep.subr.bf16.mxu0 0
        %573 = vmatpush1.bf16.msra.mxu0 %v530
        %574 = vmatprep.subr.bf16.mxu0 0
        %575 = vmatpush1.bf16.msra.mxu0 %v531
        %576 = vmatprep.subr.bf16.mxu0 0
        %577 = vmatpush1.bf16.msra.mxu0 %v532
        %578 = vmatprep.subr.bf16.mxu0 0
        %579 = vmatpush1.bf16.msra.mxu0 %v533
        %580 = vmatprep.subr.bf16.mxu0 0
        %581 = vmatpush1.bf16.msra.mxu0 %v534
        %582 = vmatprep.subr.bf16.mxu0 0
        %583 = vmatpush1.bf16.msra.mxu0 %v535
        %584 = vmatprep.mubr.bf16.mxu0 %v409
        %585 = vmatmul.mubr.bf16.gmra.mrb[0].mxu0 %v408
        %v586 = vpop.f32.mrb[0].mxu0
        %v587 = vadd.f32 0.0, %v586
        %v588 = vpop.f32.mrb[0].mxu0
        %v589 = vpop.f32.mrb[0].mxu0
        %v590 = vadd.f32 0.0, %v589
        %v591 = vpop.f32.mrb[0].mxu0
        %592 = vmatprep.mubr.bf16.mxu0 %v411
        %593 = vmatmul.mubr.bf16.gmra.mrb[0].mxu0 %v410
        %v594 = vpop.f32.mrb[0].mxu0
        %v595 = vadd.f32 0.0, %v594
        %v596 = vpop.f32.mrb[0].mxu0
        %v597 = vpop.f32.mrb[0].mxu0
        %v598 = vadd.f32 0.0, %v597
        %v599 = vpop.f32.mrb[0].mxu0
        %600 = vmatprep.mubr.bf16.mxu0 %v413
        %601 = vmatmul.mubr.bf16.gmra.mrb[0].mxu0 %v412
        %v602 = vpop.f32.mrb[0].mxu0
        %v603 = vadd.f32 0.0, %v602
        %v604 = vpop.f32.mrb[0].mxu0
        %v605 = vpop.f32.mrb[0].mxu0
        %v606 = vadd.f32 0.0, %v605
        %v607 = vpop.f32.mrb[0].mxu0
        %608 = vmatprep.mubr.bf16.mxu0 %v415
        %609 = vmatmul.mubr.bf16.gmra.mrb[0].mxu0 %v414
        %v610 = vpop.f32.mrb[0].mxu0
        %v611 = vadd.f32 0.0, %v610
        %v612 = vpop.f32.mrb[0].mxu0
        %v613 = vpop.f32.mrb[0].mxu0
        %v614 = vadd.f32 0.0, %v613
        %v615 = vpop.f32.mrb[0].mxu0
        %616 = vmatprep.mubr.bf16.mxu0 %v417
        %617 = vmatmul.mubr.bf16.gmra.mrb[0].mxu0 %v416
        %v618 = vpop.f32.mrb[0].mxu0
        %v619 = vadd.f32 0.0, %v618
        %v620 = vpop.f32.mrb[0].mxu0
        %v621 = vpop.f32.mrb[0].mxu0
        %v622 = vadd.f32 0.0, %v621
        %v623 = vpop.f32.mrb[0].mxu0
        %624 = vmatprep.mubr.bf16.mxu0 %v419
        %625 = vmatmul.mubr.bf16.gmra.mrb[0].mxu0 %v418
        %v626 = vpop.f32.mrb[0].mxu0
        %v627 = vadd.f32 0.0, %v626
        %v628 = vpop.f32.mrb[0].mxu0
        %v629 = vpop.f32.mrb[0].mxu0
        %v630 = vadd.f32 0.0, %v629
        %v631 = vpop.f32.mrb[0].mxu0
        %632 = vmatprep.mubr.bf16.mxu0 %v421
        %633 = vmatmul.mubr.bf16.gmra.mrb[0].mxu0 %v420
        %v634 = vpop.f32.mrb[0].mxu0
        %v635 = vadd.f32 0.0, %v634
        %v636 = vpop.f32.mrb[0].mxu0
        %v637 = vpop.f32.mrb[0].mxu0
        %v638 = vadd.f32 0.0, %v637
        %v639 = vpop.f32.mrb[0].mxu0
        %640 = vmatprep.mubr.bf16.mxu0 %v423
        %641 = vmatmul.mubr.bf16.gmra.mrb[0].mxu0 %v422
        %v642 = vpop.f32.mrb[0].mxu0
        %v643 = vadd.f32 0.0, %v642
        %v644 = vpop.f32.mrb[0].mxu0
        %v645 = vpop.f32.mrb[0].mxu0
        %v646 = vadd.f32 0.0, %v645
        %v647 = vpop.f32.mrb[0].mxu0
        %648 = vdwg.mxu0
        %p649 = scmp.eq.s32.totalorder %s23, 0
        // Predicated region
        $region72: #{graphsage_forward.2} parent=66 // pred_check
          %p650 = pneg %p649
        $region73: #{graphsage_forward.2} parent=66 // pred_check_branch
          %652 = sbr.rel (%p650) target = $region75
        $region74: #{graphsage_forward.2} parent=66 // pred_region
          %653 = vst [vmem:[#allocation2] sm:$0xff] %v587
          %654 = vst [vmem:[#allocation2 + $0x8] sm:$0xff] %v590
          %655 = vst [vmem:[#allocation2 + $0x10] sm:$0xff] %v595
          %656 = vst [vmem:[#allocation2 + $0x18] sm:$0xff] %v598
          %657 = vst [vmem:[#allocation2 + $0x20] sm:$0xff] %v603
          %658 = vst [vmem:[#allocation2 + $0x28] sm:$0xff] %v606
          %659 = vst [vmem:[#allocation2 + $0x30] sm:$0xff] %v611
          %660 = vst [vmem:[#allocation2 + $0x38] sm:$0xff] %v614
          %661 = vst [vmem:[#allocation2 + $0x40] sm:$0xff] %v619
          %662 = vst [vmem:[#allocation2 + $0x48] sm:$0xff] %v622
          %663 = vst [vmem:[#allocation2 + $0x50] sm:$0xff] %v627
          %664 = vst [vmem:[#allocation2 + $0x58] sm:$0xff] %v630
          %665 = vst [vmem:[#allocation2 + $0x60] sm:$0xff] %v635
          %666 = vst [vmem:[#allocation2 + $0x68] sm:$0xff] %v638
          %667 = vst [vmem:[#allocation2 + $0x70] sm:$0xff] %v643
          %668 = vst [vmem:[#allocation2 + $0x78] sm:$0xff] %v646
          %v669 = vld [vmem:[%s385] sm:$0xf]
          %v670 = vld [vmem:[%s385 + $0x4] sm:$0xf]
          %v671 = vld [vmem:[%s385 + $0x8] sm:$0xf]
          %v672 = vld [vmem:[%s385 + $0xc] sm:$0xf]
          %v673 = vld [vmem:[%s385 + $0x10] sm:$0xf]
          %v674 = vld [vmem:[%s385 + $0x14] sm:$0xf]
          %v675 = vld [vmem:[%s385 + $0x18] sm:$0xf]
          %v676 = vld [vmem:[%s385 + $0x1c] sm:$0xf]
          %v677 = vld [vmem:[%s385 + $0x20] sm:$0xf]
          %v678 = vld [vmem:[%s385 + $0x24] sm:$0xf]
          %v679 = vld [vmem:[%s385 + $0x28] sm:$0xf]
          %v680 = vld [vmem:[%s385 + $0x2c] sm:$0xf]
          %v681 = vld [vmem:[%s385 + $0x30] sm:$0xf]
          %v682 = vld [vmem:[%s385 + $0x34] sm:$0xf]
          %v683 = vld [vmem:[%s385 + $0x38] sm:$0xf]
          %v684 = vld [vmem:[%s385 + $0x3c] sm:$0xf]
          %v685 = vld [vmem:[%s4] sm:$0xf]
          %v686 = vld [vmem:[%s4 + $0x4] sm:$0xf]
          %v687 = vld [vmem:[%s4 + $0x8] sm:$0xf]
          %v688 = vld [vmem:[%s4 + $0xc] sm:$0xf]
          %v689 = vld [vmem:[%s4 + $0x10] sm:$0xf]
          %v690 = vld [vmem:[%s4 + $0x14] sm:$0xf]
          %v691 = vld [vmem:[%s4 + $0x18] sm:$0xf]
          %v692 = vld [vmem:[%s4 + $0x1c] sm:$0xf]
          %v693 = vld [vmem:[%s4 + $0x20] sm:$0xf]
          %v694 = vld [vmem:[%s4 + $0x24] sm:$0xf]
          %v695 = vld [vmem:[%s4 + $0x28] sm:$0xf]
          %v696 = vld [vmem:[%s4 + $0x2c] sm:$0xf]
          %v697 = vld [vmem:[%s4 + $0x30] sm:$0xf]
          %v698 = vld [vmem:[%s4 + $0x34] sm:$0xf]
          %v699 = vld [vmem:[%s4 + $0x38] sm:$0xf]
          %v700 = vld [vmem:[%s4 + $0x3c] sm:$0xf]
          %v701 = vld [vmem:[%s6] sm:$0x1]
          %v703 = vlaneseq
          %v704 = vshrl.u32 %v703, 7
          %v705 = vsub.s32 0, %v704
          %v706 = vrot.slane %v701, %v705
          %v724 = vunpack.c.l.b16 %v669
          %v725 = vunpack.c.l.b16 %v670
          %v726 = vunpack.c.l.b16 %v671
          %v727 = vunpack.c.l.b16 %v672
          %v728 = vunpack.c.l.b16 %v673
          %v729 = vunpack.c.l.b16 %v674
          %v730 = vunpack.c.l.b16 %v675
          %v731 = vunpack.c.l.b16 %v676
          %v732 = vunpack.c.l.b16 %v677
          %v733 = vunpack.c.l.b16 %v678
          %v734 = vunpack.c.l.b16 %v679
          %v735 = vunpack.c.l.b16 %v680
          %v736 = vunpack.c.l.b16 %v681
          %v737 = vunpack.c.l.b16 %v682
          %v738 = vunpack.c.l.b16 %v683
          %v739 = vunpack.c.l.b16 %v684
          %v740 = vpack.c.b16 %v725, %v724
          %v741 = vpack.c.b16 %v727, %v726
          %v742 = vpack.c.b16 %v729, %v728
          %v743 = vpack.c.b16 %v731, %v730
          %v744 = vpack.c.b16 %v733, %v732
          %v745 = vpack.c.b16 %v735, %v734
          %v746 = vpack.c.b16 %v737, %v736
          %v747 = vpack.c.b16 %v739, %v738
          %v772 = vunpack.c.l.b16 %v685
          %v773 = vunpack.c.l.b16 %v686
          %v774 = vunpack.c.l.b16 %v687
          %v775 = vunpack.c.l.b16 %v688
          %v776 = vunpack.c.l.b16 %v689
          %v777 = vunpack.c.l.b16 %v690
          %v778 = vunpack.c.l.b16 %v691
          %v779 = vunpack.c.l.b16 %v692
          %v780 = vunpack.c.l.b16 %v693
          %v781 = vunpack.c.l.b16 %v694
          %v782 = vunpack.c.l.b16 %v695
          %v783 = vunpack.c.l.b16 %v696
          %v784 = vunpack.c.l.b16 %v697
          %v785 = vunpack.c.l.b16 %v698
          %v786 = vunpack.c.l.b16 %v699
          %v787 = vunpack.c.l.b16 %v700
          %v788 = vpack.c.b16 %v773, %v772
          %v789 = vpack.c.b16 %v775, %v774
          %v790 = vpack.c.b16 %v777, %v776
          %v791 = vpack.c.b16 %v779, %v778
          %v792 = vpack.c.b16 %v781, %v780
          %v793 = vpack.c.b16 %v783, %v782
          %v794 = vpack.c.b16 %v785, %v784
          %v795 = vpack.c.b16 %v787, %v786
          %804 = vmatprep.subr.bf16.mxu0 0
          %805 = vmatpush1.bf16.msra.mxu0 %v788
          %806 = vmatprep.subr.bf16.mxu0 0
          %807 = vmatpush1.bf16.msra.mxu0 %v789
          %808 = vmatprep.subr.bf16.mxu0 0
          %809 = vmatpush1.bf16.msra.mxu0 %v790
          %810 = vmatprep.subr.bf16.mxu0 0
          %811 = vmatpush1.bf16.msra.mxu0 %v791
          %812 = vmatprep.subr.bf16.mxu0 0
          %813 = vmatpush1.bf16.msra.mxu0 %v792
          %814 = vmatprep.subr.bf16.mxu0 0
          %815 = vmatpush1.bf16.msra.mxu0 %v793
          %816 = vmatprep.subr.bf16.mxu0 0
          %817 = vmatpush1.bf16.msra.mxu0 %v794
          %818 = vmatprep.subr.bf16.mxu0 0
          %819 = vmatpush1.bf16.msra.mxu0 %v795
          %820 = vmatprep.subr.bf16.mxu0 0
          %821 = vmatpush1.bf16.msra.mxu0 0
          %822 = vmatprep.subr.bf16.mxu0 0
          %823 = vmatpush1.bf16.msra.mxu0 0
          %824 = vmatprep.subr.bf16.mxu0 0
          %825 = vmatpush1.bf16.msra.mxu0 0
          %826 = vmatprep.subr.bf16.mxu0 0
          %827 = vmatpush1.bf16.msra.mxu0 0
          %828 = vmatprep.subr.bf16.mxu0 0
          %829 = vmatpush1.bf16.msra.mxu0 0
          %830 = vmatprep.subr.bf16.mxu0 0
          %831 = vmatpush1.bf16.msra.mxu0 0
          %832 = vmatprep.subr.bf16.mxu0 0
          %833 = vmatpush1.bf16.msra.mxu0 0
          %834 = vmatprep.subr.bf16.mxu0 0
          %835 = vmatpush1.bf16.msra.mxu0 0
          %836 = vmatprep.mubr.bf16.mxu0 0
          %837 = vmatmul.mubr.bf16.gmra.mrb[0].mxu0 %v740
          %v838 = vpop.f32.mrb[0].mxu0
          %v839 = vadd.f32 %v706, %v838
          %v840 = vpop.f32.mrb[0].mxu0
          %v841 = vpop.f32.mrb[0].mxu0
          %v842 = vadd.f32 %v706, %v841
          %v843 = vpop.f32.mrb[0].mxu0
          %844 = vmatprep.mubr.bf16.mxu0 0
          %845 = vmatmul.mubr.bf16.gmra.mrb[0].mxu0 %v741
          %v846 = vpop.f32.mrb[0].mxu0
          %v847 = vadd.f32 %v706, %v846
          %v848 = vpop.f32.mrb[0].mxu0
          %v849 = vpop.f32.mrb[0].mxu0
          %v850 = vadd.f32 %v706, %v849
          %v851 = vpop.f32.mrb[0].mxu0
          %852 = vmatprep.mubr.bf16.mxu0 0
          %853 = vmatmul.mubr.bf16.gmra.mrb[0].mxu0 %v742
          %v854 = vpop.f32.mrb[0].mxu0
          %v855 = vadd.f32 %v706, %v854
          %v856 = vpop.f32.mrb[0].mxu0
          %v857 = vpop.f32.mrb[0].mxu0
          %v858 = vadd.f32 %v706, %v857
          %v859 = vpop.f32.mrb[0].mxu0
          %860 = vmatprep.mubr.bf16.mxu0 0
          %861 = vmatmul.mubr.bf16.gmra.mrb[0].mxu0 %v743
          %v862 = vpop.f32.mrb[0].mxu0
          %v863 = vadd.f32 %v706, %v862
          %v864 = vpop.f32.mrb[0].mxu0
          %v865 = vpop.f32.mrb[0].mxu0
          %v866 = vadd.f32 %v706, %v865
          %v867 = vpop.f32.mrb[0].mxu0
          %868 = vmatprep.mubr.bf16.mxu0 0
          %869 = vmatmul.mubr.bf16.gmra.mrb[0].mxu0 %v744
          %v870 = vpop.f32.mrb[0].mxu0
          %v871 = vadd.f32 %v706, %v870
          %v872 = vpop.f32.mrb[0].mxu0
          %v873 = vpop.f32.mrb[0].mxu0
          %v874 = vadd.f32 %v706, %v873
          %v875 = vpop.f32.mrb[0].mxu0
          %876 = vmatprep.mubr.bf16.mxu0 0
          %877 = vmatmul.mubr.bf16.gmra.mrb[0].mxu0 %v745
          %v878 = vpop.f32.mrb[0].mxu0
          %v879 = vadd.f32 %v706, %v878
          %v880 = vpop.f32.mrb[0].mxu0
          %v881 = vpop.f32.mrb[0].mxu0
          %v882 = vadd.f32 %v706, %v881
          %v883 = vpop.f32.mrb[0].mxu0
          %884 = vmatprep.mubr.bf16.mxu0 0
          %885 = vmatmul.mubr.bf16.gmra.mrb[0].mxu0 %v746
          %v886 = vpop.f32.mrb[0].mxu0
          %v887 = vadd.f32 %v706, %v886
          %v888 = vpop.f32.mrb[0].mxu0
          %v889 = vpop.f32.mrb[0].mxu0
          %v890 = vadd.f32 %v706, %v889
          %v891 = vpop.f32.mrb[0].mxu0
          %892 = vmatprep.mubr.bf16.mxu0 0
          %893 = vmatmul.mubr.bf16.gmra.mrb[0].mxu0 %v747
          %v894 = vpop.f32.mrb[0].mxu0
          %v895 = vadd.f32 %v706, %v894
          %v896 = vpop.f32.mrb[0].mxu0
          %v897 = vpop.f32.mrb[0].mxu0
          %v898 = vadd.f32 %v706, %v897
          %v899 = vpop.f32.mrb[0].mxu0
          %900 = vdwg.mxu0
          %901 = vst [vmem:[#allocation3] sm:$0xff] %v839
          %902 = vst [vmem:[#allocation3 + $0x8] sm:$0xff] %v842
          %903 = vst [vmem:[#allocation3 + $0x10] sm:$0xff] %v847
          %904 = vst [vmem:[#allocation3 + $0x18] sm:$0xff] %v850
          %905 = vst [vmem:[#allocation3 + $0x20] sm:$0xff] %v855
          %906 = vst [vmem:[#allocation3 + $0x28] sm:$0xff] %v858
          %907 = vst [vmem:[#allocation3 + $0x30] sm:$0xff] %v863
          %908 = vst [vmem:[#allocation3 + $0x38] sm:$0xff] %v866
          %909 = vst [vmem:[#allocation3 + $0x40] sm:$0xff] %v871
          %910 = vst [vmem:[#allocation3 + $0x48] sm:$0xff] %v874
          %911 = vst [vmem:[#allocation3 + $0x50] sm:$0xff] %v879
          %912 = vst [vmem:[#allocation3 + $0x58] sm:$0xff] %v882
          %913 = vst [vmem:[#allocation3 + $0x60] sm:$0xff] %v887
          %914 = vst [vmem:[#allocation3 + $0x68] sm:$0xff] %v890
          %915 = vst [vmem:[#allocation3 + $0x70] sm:$0xff] %v895
          %916 = vst [vmem:[#allocation3 + $0x78] sm:$0xff] %v898
        $region75: #{graphsage_forward.2} parent=66 // pred_fallthru
          _
        %p917 = scmp.gt.s32.totalorder %s23, 0
        // Predicated region
        $region76: #{graphsage_forward.2} parent=66 // pred_check
          %p918 = pneg %p917
        $region77: #{graphsage_forward.2} parent=66 // pred_check_branch
          %920 = sbr.rel (%p918) target = $region79
        $region78: #{graphsage_forward.2} parent=66 // pred_region
          %v921 = vld [vmem:[#allocation2] sm:$0xff]
          %v922 = vld [vmem:[#allocation2 + $0x8] sm:$0xff]
          %v923 = vld [vmem:[#allocation2 + $0x10] sm:$0xff]
          %v924 = vld [vmem:[#allocation2 + $0x18] sm:$0xff]
          %v925 = vld [vmem:[#allocation2 + $0x20] sm:$0xff]
          %v926 = vld [vmem:[#allocation2 + $0x28] sm:$0xff]
          %v927 = vld [vmem:[#allocation2 + $0x30] sm:$0xff]
          %v928 = vld [vmem:[#allocation2 + $0x38] sm:$0xff]
          %v929 = vld [vmem:[#allocation2 + $0x40] sm:$0xff]
          %v930 = vld [vmem:[#allocation2 + $0x48] sm:$0xff]
          %v931 = vld [vmem:[#allocation2 + $0x50] sm:$0xff]
          %v932 = vld [vmem:[#allocation2 + $0x58] sm:$0xff]
          %v933 = vld [vmem:[#allocation2 + $0x60] sm:$0xff]
          %v934 = vld [vmem:[#allocation2 + $0x68] sm:$0xff]
          %v935 = vld [vmem:[#allocation2 + $0x70] sm:$0xff]
          %v936 = vld [vmem:[#allocation2 + $0x78] sm:$0xff]
          %v937 = vadd.f32 %v921, %v587
          %v938 = vadd.f32 %v922, %v590
          %v939 = vadd.f32 %v923, %v595
          %v940 = vadd.f32 %v924, %v598
          %v941 = vadd.f32 %v925, %v603
          %v942 = vadd.f32 %v926, %v606
          %v943 = vadd.f32 %v927, %v611
          %v944 = vadd.f32 %v928, %v614
          %v945 = vadd.f32 %v929, %v619
          %v946 = vadd.f32 %v930, %v622
          %v947 = vadd.f32 %v931, %v627
          %v948 = vadd.f32 %v932, %v630
          %v949 = vadd.f32 %v933, %v635
          %v950 = vadd.f32 %v934, %v638
          %v951 = vadd.f32 %v935, %v643
          %v952 = vadd.f32 %v936, %v646
          %953 = vst [vmem:[#allocation2] sm:$0xff] %v937
          %954 = vst [vmem:[#allocation2 + $0x8] sm:$0xff] %v938
          %955 = vst [vmem:[#allocation2 + $0x10] sm:$0xff] %v939
          %956 = vst [vmem:[#allocation2 + $0x18] sm:$0xff] %v940
          %957 = vst [vmem:[#allocation2 + $0x20] sm:$0xff] %v941
          %958 = vst [vmem:[#allocation2 + $0x28] sm:$0xff] %v942
          %959 = vst [vmem:[#allocation2 + $0x30] sm:$0xff] %v943
          %960 = vst [vmem:[#allocation2 + $0x38] sm:$0xff] %v944
          %961 = vst [vmem:[#allocation2 + $0x40] sm:$0xff] %v945
          %962 = vst [vmem:[#allocation2 + $0x48] sm:$0xff] %v946
          %963 = vst [vmem:[#allocation2 + $0x50] sm:$0xff] %v947
          %964 = vst [vmem:[#allocation2 + $0x58] sm:$0xff] %v948
          %965 = vst [vmem:[#allocation2 + $0x60] sm:$0xff] %v949
          %966 = vst [vmem:[#allocation2 + $0x68] sm:$0xff] %v950
          %967 = vst [vmem:[#allocation2 + $0x70] sm:$0xff] %v951
          %968 = vst [vmem:[#allocation2 + $0x78] sm:$0xff] %v952
        $region79: #{graphsage_forward.2} parent=66 // pred_fallthru
          _
        %p969 = scmp.eq.s32.totalorder %s23, 1
        // Predicated region
        $region80: #{graphsage_forward.2} parent=66 // pred_check
          %p970 = pneg %p969
        $region81: #{graphsage_forward.2} parent=66 // pred_check_branch
          %972 = sbr.rel (%p970) target = $region83
        $region82: #{graphsage_forward.2} parent=66 // pred_region
          %v973 = vld [vmem:[#allocation2] sm:$0xff]
          %v974 = vld [vmem:[#allocation2 + $0x8] sm:$0xff]
          %v975 = vld [vmem:[#allocation2 + $0x10] sm:$0xff]
          %v976 = vld [vmem:[#allocation2 + $0x18] sm:$0xff]
          %v977 = vld [vmem:[#allocation2 + $0x20] sm:$0xff]
          %v978 = vld [vmem:[#allocation2 + $0x28] sm:$0xff]
          %v979 = vld [vmem:[#allocation2 + $0x30] sm:$0xff]
          %v980 = vld [vmem:[#allocation2 + $0x38] sm:$0xff]
          %v981 = vld [vmem:[#allocation2 + $0x40] sm:$0xff]
          %v982 = vld [vmem:[#allocation2 + $0x48] sm:$0xff]
          %v983 = vld [vmem:[#allocation2 + $0x50] sm:$0xff]
          %v984 = vld [vmem:[#allocation2 + $0x58] sm:$0xff]
          %v985 = vld [vmem:[#allocation2 + $0x60] sm:$0xff]
          %v986 = vld [vmem:[#allocation2 + $0x68] sm:$0xff]
          %v987 = vld [vmem:[#allocation2 + $0x70] sm:$0xff]
          %v988 = vld [vmem:[#allocation2 + $0x78] sm:$0xff]
          %v989 = vld [vmem:[%s391] sm:$0xff]
          %v990 = vld [vmem:[%s391 + $0x8] sm:$0xff]
          %v991 = vld [vmem:[%s391 + $0x10] sm:$0xff]
          %v992 = vld [vmem:[%s391 + $0x18] sm:$0xff]
          %v993 = vld [vmem:[%s391 + $0x20] sm:$0xff]
          %v994 = vld [vmem:[%s391 + $0x28] sm:$0xff]
          %v995 = vld [vmem:[%s391 + $0x30] sm:$0xff]
          %v996 = vld [vmem:[%s391 + $0x38] sm:$0xff]
          %v997 = vld [vmem:[%s391 + $0x40] sm:$0xff]
          %v998 = vld [vmem:[%s391 + $0x48] sm:$0xff]
          %v999 = vld [vmem:[%s391 + $0x50] sm:$0xff]
          %v1000 = vld [vmem:[%s391 + $0x58] sm:$0xff]
          %v1001 = vld [vmem:[%s391 + $0x60] sm:$0xff]
          %v1002 = vld [vmem:[%s391 + $0x68] sm:$0xff]
          %v1003 = vld [vmem:[%s391 + $0x70] sm:$0xff]
          %v1004 = vld [vmem:[%s391 + $0x78] sm:$0xff]
          %1006 = vset.pattern.permute.xlu0 0
          %1007 = vperm.xlu0 %1006, %v989
          %v1008 = vpop.permute.xlu0 %1007
          %1011 = vset.pattern.permute.xlu0 0
          %1012 = vperm.xlu0 %1011, %v990
          %v1013 = vpop.permute.xlu0 %1012
          %1016 = vset.pattern.permute.xlu0 0
          %1017 = vperm.xlu0 %1016, %v991
          %v1018 = vpop.permute.xlu0 %1017
          %1021 = vset.pattern.permute.xlu0 0
          %1022 = vperm.xlu0 %1021, %v992
          %v1023 = vpop.permute.xlu0 %1022
          %1026 = vset.pattern.permute.xlu0 0
          %1027 = vperm.xlu0 %1026, %v993
          %v1028 = vpop.permute.xlu0 %1027
          %1031 = vset.pattern.permute.xlu0 0
          %1032 = vperm.xlu0 %1031, %v994
          %v1033 = vpop.permute.xlu0 %1032
          %1036 = vset.pattern.permute.xlu0 0
          %1037 = vperm.xlu0 %1036, %v995
          %v1038 = vpop.permute.xlu0 %1037
          %1041 = vset.pattern.permute.xlu0 0
          %1042 = vperm.xlu0 %1041, %v996
          %v1043 = vpop.permute.xlu0 %1042
          %1046 = vset.pattern.permute.xlu0 0
          %1047 = vperm.xlu0 %1046, %v997
          %v1048 = vpop.permute.xlu0 %1047
          %1051 = vset.pattern.permute.xlu0 0
          %1052 = vperm.xlu0 %1051, %v998
          %v1053 = vpop.permute.xlu0 %1052
          %1056 = vset.pattern.permute.xlu0 0
          %1057 = vperm.xlu0 %1056, %v999
          %v1058 = vpop.permute.xlu0 %1057
          %1061 = vset.pattern.permute.xlu0 0
          %1062 = vperm.xlu0 %1061, %v1000
          %v1063 = vpop.permute.xlu0 %1062
          %1066 = vset.pattern.permute.xlu0 0
          %1067 = vperm.xlu0 %1066, %v1001
          %v1068 = vpop.permute.xlu0 %1067
          %1071 = vset.pattern.permute.xlu0 0
          %1072 = vperm.xlu0 %1071, %v1002
          %v1073 = vpop.permute.xlu0 %1072
          %1076 = vset.pattern.permute.xlu0 0
          %1077 = vperm.xlu0 %1076, %v1003
          %v1078 = vpop.permute.xlu0 %1077
          %1081 = vset.pattern.permute.xlu0 0
          %1082 = vperm.xlu0 %1081, %v1004
          %v1083 = vpop.permute.xlu0 %1082
          %v1085 = vmul.f32 %v973, %v1008
          %v1086 = vmul.f32 %v974, %v1013
          %v1087 = vmul.f32 %v975, %v1018
          %v1088 = vmul.f32 %v976, %v1023
          %v1089 = vmul.f32 %v977, %v1028
          %v1090 = vmul.f32 %v978, %v1033
          %v1091 = vmul.f32 %v979, %v1038
          %v1092 = vmul.f32 %v980, %v1043
          %v1093 = vmul.f32 %v981, %v1048
          %v1094 = vmul.f32 %v982, %v1053
          %v1095 = vmul.f32 %v983, %v1058
          %v1096 = vmul.f32 %v984, %v1063
          %v1097 = vmul.f32 %v985, %v1068
          %v1098 = vmul.f32 %v986, %v1073
          %v1099 = vmul.f32 %v987, %v1078
          %v1100 = vmul.f32 %v988, %v1083
          %v1101 = vpack.c.bf16 %v1086, %v1085
          %v1102 = vpack.c.bf16 %v1088, %v1087
          %v1103 = vpack.c.bf16 %v1090, %v1089
          %v1104 = vpack.c.bf16 %v1092, %v1091
          %v1105 = vpack.c.bf16 %v1094, %v1093
          %v1106 = vpack.c.bf16 %v1096, %v1095
          %v1107 = vpack.c.bf16 %v1098, %v1097
          %v1108 = vpack.c.bf16 %v1100, %v1099
          %v1109 = vld [vmem:[#allocation3] sm:$0xff]
          %v1110 = vld [vmem:[#allocation3 + $0x8] sm:$0xff]
          %v1111 = vld [vmem:[#allocation3 + $0x10] sm:$0xff]
          %v1112 = vld [vmem:[#allocation3 + $0x18] sm:$0xff]
          %v1113 = vld [vmem:[#allocation3 + $0x20] sm:$0xff]
          %v1114 = vld [vmem:[#allocation3 + $0x28] sm:$0xff]
          %v1115 = vld [vmem:[#allocation3 + $0x30] sm:$0xff]
          %v1116 = vld [vmem:[#allocation3 + $0x38] sm:$0xff]
          %v1117 = vld [vmem:[#allocation3 + $0x40] sm:$0xff]
          %v1118 = vld [vmem:[#allocation3 + $0x48] sm:$0xff]
          %v1119 = vld [vmem:[#allocation3 + $0x50] sm:$0xff]
          %v1120 = vld [vmem:[#allocation3 + $0x58] sm:$0xff]
          %v1121 = vld [vmem:[#allocation3 + $0x60] sm:$0xff]
          %v1122 = vld [vmem:[#allocation3 + $0x68] sm:$0xff]
          %v1123 = vld [vmem:[#allocation3 + $0x70] sm:$0xff]
          %v1124 = vld [vmem:[#allocation3 + $0x78] sm:$0xff]
          %v1125 = vld [vmem:[%s5] sm:$0xf]
          %v1126 = vld [vmem:[%s5 + $0x4] sm:$0xf]
          %v1127 = vld [vmem:[%s5 + $0x8] sm:$0xf]
          %v1128 = vld [vmem:[%s5 + $0xc] sm:$0xf]
          %v1129 = vld [vmem:[%s5 + $0x10] sm:$0xf]
          %v1130 = vld [vmem:[%s5 + $0x14] sm:$0xf]
          %v1131 = vld [vmem:[%s5 + $0x18] sm:$0xf]
          %v1132 = vld [vmem:[%s5 + $0x1c] sm:$0xf]
          %v1133 = vld [vmem:[%s5 + $0x20] sm:$0xf]
          %v1134 = vld [vmem:[%s5 + $0x24] sm:$0xf]
          %v1135 = vld [vmem:[%s5 + $0x28] sm:$0xf]
          %v1136 = vld [vmem:[%s5 + $0x2c] sm:$0xf]
          %v1137 = vld [vmem:[%s5 + $0x30] sm:$0xf]
          %v1138 = vld [vmem:[%s5 + $0x34] sm:$0xf]
          %v1139 = vld [vmem:[%s5 + $0x38] sm:$0xf]
          %v1140 = vld [vmem:[%s5 + $0x3c] sm:$0xf]
          %v1157 = vunpack.c.l.b16 %v1125
          %v1158 = vunpack.c.l.b16 %v1126
          %v1159 = vunpack.c.l.b16 %v1127
          %v1160 = vunpack.c.l.b16 %v1128
          %v1161 = vunpack.c.l.b16 %v1129
          %v1162 = vunpack.c.l.b16 %v1130
          %v1163 = vunpack.c.l.b16 %v1131
          %v1164 = vunpack.c.l.b16 %v1132
          %v1165 = vunpack.c.l.b16 %v1133
          %v1166 = vunpack.c.l.b16 %v1134
          %v1167 = vunpack.c.l.b16 %v1135
          %v1168 = vunpack.c.l.b16 %v1136
          %v1169 = vunpack.c.l.b16 %v1137
          %v1170 = vunpack.c.l.b16 %v1138
          %v1171 = vunpack.c.l.b16 %v1139
          %v1172 = vunpack.c.l.b16 %v1140
          %v1173 = vpack.c.b16 %v1158, %v1157
          %v1174 = vpack.c.b16 %v1160, %v1159
          %v1175 = vpack.c.b16 %v1162, %v1161
          %v1176 = vpack.c.b16 %v1164, %v1163
          %v1177 = vpack.c.b16 %v1166, %v1165
          %v1178 = vpack.c.b16 %v1168, %v1167
          %v1179 = vpack.c.b16 %v1170, %v1169
          %v1180 = vpack.c.b16 %v1172, %v1171
          %1189 = vmatprep.subr.bf16.mxu0 0
          %1190 = vmatpush1.bf16.msra.mxu0 %v1173
          %1191 = vmatprep.subr.bf16.mxu0 0
          %1192 = vmatpush1.bf16.msra.mxu0 %v1174
          %1193 = vmatprep.subr.bf16.mxu0 0
          %1194 = vmatpush1.bf16.msra.mxu0 %v1175
          %1195 = vmatprep.subr.bf16.mxu0 0
          %1196 = vmatpush1.bf16.msra.mxu0 %v1176
          %1197 = vmatprep.subr.bf16.mxu0 0
          %1198 = vmatpush1.bf16.msra.mxu0 %v1177
          %1199 = vmatprep.subr.bf16.mxu0 0
          %1200 = vmatpush1.bf16.msra.mxu0 %v1178
          %1201 = vmatprep.subr.bf16.mxu0 0
          %1202 = vmatpush1.bf16.msra.mxu0 %v1179
          %1203 = vmatprep.subr.bf16.mxu0 0
          %1204 = vmatpush1.bf16.msra.mxu0 %v1180
          %1205 = vmatprep.subr.bf16.mxu0 0
          %1206 = vmatpush1.bf16.msra.mxu0 0
          %1207 = vmatprep.subr.bf16.mxu0 0
          %1208 = vmatpush1.bf16.msra.mxu0 0
          %1209 = vmatprep.subr.bf16.mxu0 0
          %1210 = vmatpush1.bf16.msra.mxu0 0
          %1211 = vmatprep.subr.bf16.mxu0 0
          %1212 = vmatpush1.bf16.msra.mxu0 0
          %1213 = vmatprep.subr.bf16.mxu0 0
          %1214 = vmatpush1.bf16.msra.mxu0 0
          %1215 = vmatprep.subr.bf16.mxu0 0
          %1216 = vmatpush1.bf16.msra.mxu0 0
          %1217 = vmatprep.subr.bf16.mxu0 0
          %1218 = vmatpush1.bf16.msra.mxu0 0
          %1219 = vmatprep.subr.bf16.mxu0 0
          %1220 = vmatpush1.bf16.msra.mxu0 0
          %1221 = vmatprep.mubr.bf16.mxu0 0
          %1222 = vmatmul.mubr.bf16.gmra.mrb[0].mxu0 %v1101
          %v1223 = vpop.f32.mrb[0].mxu0
          %v1224 = vadd.f32 0.0, %v1223
          %v1225 = vpop.f32.mrb[0].mxu0
          %v1226 = vpop.f32.mrb[0].mxu0
          %v1227 = vadd.f32 0.0, %v1226
          %v1228 = vpop.f32.mrb[0].mxu0
          %1229 = vmatprep.mubr.bf16.mxu0 0
          %1230 = vmatmul.mubr.bf16.gmra.mrb[0].mxu0 %v1102
          %v1231 = vpop.f32.mrb[0].mxu0
          %v1232 = vadd.f32 0.0, %v1231
          %v1233 = vpop.f32.mrb[0].mxu0
          %v1234 = vpop.f32.mrb[0].mxu0
          %v1235 = vadd.f32 0.0, %v1234
          %v1236 = vpop.f32.mrb[0].mxu0
          %1237 = vmatprep.mubr.bf16.mxu0 0
          %1238 = vmatmul.mubr.bf16.gmra.mrb[0].mxu0 %v1103
          %v1239 = vpop.f32.mrb[0].mxu0
          %v1240 = vadd.f32 0.0, %v1239
          %v1241 = vpop.f32.mrb[0].mxu0
          %v1242 = vpop.f32.mrb[0].mxu0
          %v1243 = vadd.f32 0.0, %v1242
          %v1244 = vpop.f32.mrb[0].mxu0
          %1245 = vmatprep.mubr.bf16.mxu0 0
          %1246 = vmatmul.mubr.bf16.gmra.mrb[0].mxu0 %v1104
          %v1247 = vpop.f32.mrb[0].mxu0
          %v1248 = vadd.f32 0.0, %v1247
          %v1249 = vpop.f32.mrb[0].mxu0
          %v1250 = vpop.f32.mrb[0].mxu0
          %v1251 = vadd.f32 0.0, %v1250
          %v1252 = vpop.f32.mrb[0].mxu0
          %1253 = vmatprep.mubr.bf16.mxu0 0
          %1254 = vmatmul.mubr.bf16.gmra.mrb[0].mxu0 %v1105
          %v1255 = vpop.f32.mrb[0].mxu0
          %v1256 = vadd.f32 0.0, %v1255
          %v1257 = vpop.f32.mrb[0].mxu0
          %v1258 = vpop.f32.mrb[0].mxu0
          %v1259 = vadd.f32 0.0, %v1258
          %v1260 = vpop.f32.mrb[0].mxu0
          %1261 = vmatprep.mubr.bf16.mxu0 0
          %1262 = vmatmul.mubr.bf16.gmra.mrb[0].mxu0 %v1106
          %v1263 = vpop.f32.mrb[0].mxu0
          %v1264 = vadd.f32 0.0, %v1263
          %v1265 = vpop.f32.mrb[0].mxu0
          %v1266 = vpop.f32.mrb[0].mxu0
          %v1267 = vadd.f32 0.0, %v1266
          %v1268 = vpop.f32.mrb[0].mxu0
          %1269 = vmatprep.mubr.bf16.mxu0 0
          %1270 = vmatmul.mubr.bf16.gmra.mrb[0].mxu0 %v1107
          %v1271 = vpop.f32.mrb[0].mxu0
          %v1272 = vadd.f32 0.0, %v1271
          %v1273 = vpop.f32.mrb[0].mxu0
          %v1274 = vpop.f32.mrb[0].mxu0
          %v1275 = vadd.f32 0.0, %v1274
          %v1276 = vpop.f32.mrb[0].mxu0
          %1277 = vmatprep.mubr.bf16.mxu0 0
          %1278 = vmatmul.mubr.bf16.gmra.mrb[0].mxu0 %v1108
          %v1279 = vpop.f32.mrb[0].mxu0
          %v1280 = vadd.f32 0.0, %v1279
          %v1281 = vpop.f32.mrb[0].mxu0
          %v1282 = vpop.f32.mrb[0].mxu0
          %v1283 = vadd.f32 0.0, %v1282
          %v1284 = vpop.f32.mrb[0].mxu0
          %1285 = vdwg.mxu0
          %v1286 = vadd.f32 %v1109, %v1224
          %v1287 = vadd.f32 %v1110, %v1227
          %v1288 = vadd.f32 %v1111, %v1232
          %v1289 = vadd.f32 %v1112, %v1235
          %v1290 = vadd.f32 %v1113, %v1240
          %v1291 = vadd.f32 %v1114, %v1243
          %v1292 = vadd.f32 %v1115, %v1248
          %v1293 = vadd.f32 %v1116, %v1251
          %v1294 = vadd.f32 %v1117, %v1256
          %v1295 = vadd.f32 %v1118, %v1259
          %v1296 = vadd.f32 %v1119, %v1264
          %v1297 = vadd.f32 %v1120, %v1267
          %v1298 = vadd.f32 %v1121, %v1272
          %v1299 = vadd.f32 %v1122, %v1275
          %v1300 = vadd.f32 %v1123, %v1280
          %v1301 = vadd.f32 %v1124, %v1283
          %v1302 = vmax.f32 %v1286, 0.0
          %v1303 = vmax.f32 %v1287, 0.0
          %v1304 = vmax.f32 %v1288, 0.0
          %v1305 = vmax.f32 %v1289, 0.0
          %v1306 = vmax.f32 %v1290, 0.0
          %v1307 = vmax.f32 %v1291, 0.0
          %v1308 = vmax.f32 %v1292, 0.0
          %v1309 = vmax.f32 %v1293, 0.0
          %v1310 = vmax.f32 %v1294, 0.0
          %v1311 = vmax.f32 %v1295, 0.0
          %v1312 = vmax.f32 %v1296, 0.0
          %v1313 = vmax.f32 %v1297, 0.0
          %v1314 = vmax.f32 %v1298, 0.0
          %v1315 = vmax.f32 %v1299, 0.0
          %v1316 = vmax.f32 %v1300, 0.0
          %v1317 = vmax.f32 %v1301, 0.0
          %v1318 = vpack.c.bf16 %v1303, %v1302
          %v1319 = vpack.c.bf16 %v1305, %v1304
          %v1320 = vpack.c.bf16 %v1307, %v1306
          %v1321 = vpack.c.bf16 %v1309, %v1308
          %v1322 = vpack.c.bf16 %v1311, %v1310
          %v1323 = vpack.c.bf16 %v1313, %v1312
          %v1324 = vpack.c.bf16 %v1315, %v1314
          %v1325 = vpack.c.bf16 %v1317, %v1316
          %v1334 = vunpack.c.l.b16 %v1318
          %v1335 = vunpack.c.h.b16 %v1318
          %v1336 = vunpack.c.l.b16 %v1319
          %v1337 = vunpack.c.h.b16 %v1319
          %v1338 = vunpack.c.l.b16 %v1320
          %v1339 = vunpack.c.h.b16 %v1320
          %v1340 = vunpack.c.l.b16 %v1321
          %v1341 = vunpack.c.h.b16 %v1321
          %v1342 = vunpack.c.l.b16 %v1322
          %v1343 = vunpack.c.h.b16 %v1322
          %v1344 = vunpack.c.l.b16 %v1323
          %v1345 = vunpack.c.h.b16 %v1323
          %v1346 = vunpack.c.l.b16 %v1324
          %v1347 = vunpack.c.h.b16 %v1324
          %v1348 = vunpack.c.l.b16 %v1325
          %v1349 = vunpack.c.h.b16 %v1325
          %v1350 = vpack.c.b16 %v1334, %v1334
          %v1351 = vpack.c.b16 %v1335, %v1335
          %v1352 = vpack.c.b16 %v1336, %v1336
          %v1353 = vpack.c.b16 %v1337, %v1337
          %v1354 = vpack.c.b16 %v1338, %v1338
          %v1355 = vpack.c.b16 %v1339, %v1339
          %v1356 = vpack.c.b16 %v1340, %v1340
          %v1357 = vpack.c.b16 %v1341, %v1341
          %v1358 = vpack.c.b16 %v1342, %v1342
          %v1359 = vpack.c.b16 %v1343, %v1343
          %v1360 = vpack.c.b16 %v1344, %v1344
          %v1361 = vpack.c.b16 %v1345, %v1345
          %v1362 = vpack.c.b16 %v1346, %v1346
          %v1363 = vpack.c.b16 %v1347, %v1347
          %v1364 = vpack.c.b16 %v1348, %v1348
          %v1365 = vpack.c.b16 %v1349, %v1349
          %1382 = vst [vmem:[%s397] sm:$0xf] %v1350
          %1383 = vst [vmem:[%s397 + $0x4] sm:$0xf] %v1351
          %1384 = vst [vmem:[%s397 + $0x8] sm:$0xf] %v1352
          %1385 = vst [vmem:[%s397 + $0xc] sm:$0xf] %v1353
          %1386 = vst [vmem:[%s397 + $0x10] sm:$0xf] %v1354
          %1387 = vst [vmem:[%s397 + $0x14] sm:$0xf] %v1355
          %1388 = vst [vmem:[%s397 + $0x18] sm:$0xf] %v1356
          %1389 = vst [vmem:[%s397 + $0x1c] sm:$0xf] %v1357
          %1390 = vst [vmem:[%s397 + $0x20] sm:$0xf] %v1358
          %1391 = vst [vmem:[%s397 + $0x24] sm:$0xf] %v1359
          %1392 = vst [vmem:[%s397 + $0x28] sm:$0xf] %v1360
          %1393 = vst [vmem:[%s397 + $0x2c] sm:$0xf] %v1361
          %1394 = vst [vmem:[%s397 + $0x30] sm:$0xf] %v1362
          %1395 = vst [vmem:[%s397 + $0x34] sm:$0xf] %v1363
          %1396 = vst [vmem:[%s397 + $0x38] sm:$0xf] %v1364
          %1397 = vst [vmem:[%s397 + $0x3c] sm:$0xf] %v1365
        $region83: #{graphsage_forward.2} parent=66 // pred_fallthru
          _
        %s1398 = smul.u32 16, %s22
        %p1399 = scmp.lt.s32.totalorder %s1398, 63
        %s1400 = scalar_select %p1399, %s1398, 63
        %s1401 = smul.addr %s1400, 4
        %s1402 = scalar_lea.vmem %s7, %s1401
        // Predicated region
        $region84: #{graphsage_forward.2} parent=66 // pred_check
          %p1403 = pneg %p217
        $region85: #{graphsage_forward.2} parent=66 // pred_check_branch
          %1405 = sbr.rel (%p1403) target = $region87
        $region86: #{graphsage_forward.2} parent=66 // pred_region
          %s1406 = smul.u32 16, %s22
        $region87: #{graphsage_forward.2} parent=66 // pred_fallthru
          _
      $region67: #{graphsage_forward.2} parent=5 // pred_fallthru
        _
      %p1407 = scmp.le.s32.totalorder 2, %s13
      // Predicated region
      $region88: #{graphsage_forward.2} parent=5 // pred_check
        %p1408 = pneg %p1407
      $region89: #{graphsage_forward.2} parent=5 // pred_check_branch
        %1410 = sbr.rel (%p1408) target = $region91
      $region90: #{graphsage_forward.2} parent=5 // pred_region
        %s1411 = ssub.s32 %s13, 2
        // Predicated region
        $region92: #{graphsage_forward.2} parent=90 // pred_check
          %p1412 = pneg %p223
        $region93: #{graphsage_forward.2} parent=90 // pred_check_branch
          %1414 = sbr.rel (%p1412) target = $region95
        $region94: #{graphsage_forward.2} parent=90 // pred_region
          %s1415 = smul.u32 16, %s24
          %p1416 = scmp.lt.s32.totalorder %s1415, 63
          %s1417 = scalar_select %p1416, %s1415, 63
          %s1418 = smul.addr %s1417, 4
          %s1419 = scalar_lea.vmem %s7, %s1418
        $region95: #{graphsage_forward.2} parent=90 // pred_fallthru
          _
      $region91: #{graphsage_forward.2} parent=5 // pred_fallthru
        _
    $region6: #{graphsage_forward.2} parent=1 // loop_footer
      %s17 = sadd.s32 1, %s13
    $region7: #{graphsage_forward.2} parent=1 // loop_footer_branch
      %12 = sbr.rel target = $region3
    $region8: #{graphsage_forward.2} parent=1 // loop_exit
      _

</llo_original>
